<compile_context>
chip_gen: v7x
topology: tpu7x:2x2x1
jax: 0.10.0
libtpu: 0.0.40
codegen_flags: <defaults>
</compile_context>

<pallas_src>
import jax
import jax.numpy as jnp
from jax import lax
from jax.experimental import pallas as pl
from jax.experimental.pallas import tpu as pltpu

ACTION_DIM = 2
ENVIRONMENT_DIM = 24
ROBOT_DIM = 4
STATE_DIM = ENVIRONMENT_DIM + ROBOT_DIM  # 28
H1 = 800
H2 = 600


def actor_kernel(s_ref, w1_ref, b1_ref, w2_ref, b2_ref, w3_ref, b3_ref, o_ref):
    # layer 1 (all f32): (TB, 28) @ (28, 800) -> f32, +bias, ReLU
    h1 = jnp.dot(s_ref[...], w1_ref[...], preferred_element_type=jnp.float32)
    h1 = jnp.maximum(h1 + b1_ref[...], 0.0)

    # layer 2: (TB, 800) bf16 @ (800, 600) bf16 -> f32 acc, +bias, ReLU
    h2 = jnp.dot(h1.astype(jnp.bfloat16), w2_ref[...],
                 preferred_element_type=jnp.float32)
    h2 = jnp.maximum(h2 + b2_ref[...], 0.0)

    # layer 3, transposed / lane-dense: w3 is (ACTION_DIM, 600) bf16 (PyTorch
    # layout); contract dim 1 of w3 with dim 1 of h2 -> (ACTION_DIM, TB).
    a = lax.dot_general(
        w3_ref[...], h2.astype(jnp.bfloat16),
        dimension_numbers=(((1,), (1,)), ((), ())),
        preferred_element_type=jnp.float32)
    o_ref[...] = jnp.tanh(a + b3_ref[...]).astype(o_ref.dtype)


def actor_forward(s, params, tile_b=1024, core_parallel=False):
    """s: (B, STATE_DIM) float32.  Returns (B, ACTION_DIM) float32.

    tile_b: batch tile per grid step (1024 suits v6e/v7x; 512-1024 on v5e).
    core_parallel: set True on v7x at large B to split batch tiles across
    both TensorCores.
    """
    w1, b1, w2, b2, w3, b3 = (
        params["w1"], params["b1"],
        params["w2"], params["b2"],
        params["w3"], params["b3"],
    )
    B = s.shape[0]

    # Pad batch to a multiple of 16 (bf16 sublane packing) and pick the tile.
    b_pad = max(16, pl.cdiv(B, 16) * 16)
    if b_pad <= tile_b:
        tile = b_pad
    else:
        tile = tile_b
        b_pad = pl.cdiv(B, tile) * tile
    if b_pad != B:
        s = jnp.pad(s, ((0, b_pad - B), (0, 0)))

    dim_sem = (pltpu.CORE_PARALLEL,) if core_parallel else ("parallel",)

    grid = (b_pad // tile,)
    out_t = pl.pallas_call(
        actor_kernel,
        # Transposed, lane-dense output: (ACTION_DIM, b_pad).
        out_shape=jax.ShapeDtypeStruct((ACTION_DIM, b_pad), jnp.float32),
        grid_spec=pltpu.PrefetchScalarGridSpec(
            num_scalar_prefetch=0,
            grid=grid,
            in_specs=[
                # state: tiled over batch, f32
                pl.BlockSpec((tile, STATE_DIM), lambda i: (i, 0)),
                # weights / biases: constant index_map -> VMEM-resident
                pl.BlockSpec((STATE_DIM, H1), lambda i: (0, 0)),
                pl.BlockSpec((1, H1), lambda i: (0, 0)),
                pl.BlockSpec((H1, H2), lambda i: (0, 0)),
                pl.BlockSpec((1, H2), lambda i: (0, 0)),
                pl.BlockSpec((ACTION_DIM, H2), lambda i: (0, 0)),
                pl.BlockSpec((ACTION_DIM, 1), lambda i: (0, 0)),
            ],
            out_specs=pl.BlockSpec((ACTION_DIM, tile), lambda i: (0, i)),
        ),
        compiler_params=pltpu.CompilerParams(
            dimension_semantics=dim_sem,
        ),
    )(s, w1, b1, w2, b2, w3, b3)
    # (ACTION_DIM, b_pad) -> (B, ACTION_DIM)
    return out_t[:, :B].T


def init_params(key):
    """Deterministic init mimicking nn.Linear's U(-1/sqrt(fan_in), 1/sqrt(fan_in)).

    Layouts / dtypes chosen for the kernel:
      w1: (28, 800)  f32   (pre-transposed; layer 1 stays f32)
      w2: (800, 600) bf16  (pre-transposed)
      w3: (2, 600)   bf16  (original PyTorch (out, in) layout -> transposed matmul)
      b1: (1, 800) f32, b2: (1, 600) f32, b3: (2, 1) f32
    """
    keys = jax.random.split(key, 6)

    def uniform(k, shape, fan_in):
        bound = 1.0 / jnp.sqrt(float(fan_in))
        return jax.random.uniform(k, shape, jnp.float32, -bound, bound)

    w1 = uniform(keys[0], (STATE_DIM, H1), STATE_DIM)
    b1 = uniform(keys[1], (1, H1), STATE_DIM)
    w2 = uniform(keys[2], (H1, H2), H1).astype(jnp.bfloat16)
    b2 = uniform(keys[3], (1, H2), H1)
    w3 = uniform(keys[4], (ACTION_DIM, H2), H2).astype(jnp.bfloat16)
    b3 = uniform(keys[5], (ACTION_DIM, 1), H2)
    return {"w1": w1, "b1": b1, "w2": w2, "b2": b2, "w3": w3, "b3": b3}


def actor_reference(s, params):
    """Plain-JAX f32 reference (bf16 weights upcast) for a sanity check."""
    w1 = params["w1"]
    w2 = params["w2"].astype(jnp.float32)
    w3 = params["w3"].astype(jnp.float32)
    h1 = jnp.maximum(s @ w1 + params["b1"], 0.0)
    h2 = jnp.maximum(h1 @ w2 + params["b2"], 0.0)
    return jnp.tanh(h2 @ w3.T + params["b3"].T)


if __name__ == "__main__":
    key = jax.random.PRNGKey(0)
    k_params, k_state = jax.random.split(key)

    batch = 2
    params = init_params(k_params)
    s = jax.random.normal(k_state, (batch, STATE_DIM), dtype=jnp.float32)

    out = actor_forward(s, params)
    out = jax.block_until_ready(out)

    ref = actor_reference(s, params)
    assert out.shape == (batch, ACTION_DIM)
    # layer 1 is f32; layers 2/3 use bf16 weights + f32 accumulation.
    assert jnp.allclose(out, ref, atol=3e-2, rtol=3e-2), (
        f"max abs diff {jnp.max(jnp.abs(out - ref))}")

    print("KERNEL_OK")
</pallas_src>

<mosaic_0001>
module attributes {stable_mosaic.version = 11 : i64} {
  func.func @actor_kernel(%arg0: i32, %arg1: memref<16x28xf32, #tpu.memory_space<vmem>>, %arg2: memref<28x800xf32, #tpu.memory_space<vmem>>, %arg3: memref<1x800xf32, #tpu.memory_space<vmem>>, %arg4: memref<800x600xbf16, #tpu.memory_space<vmem>>, %arg5: memref<1x600xf32, #tpu.memory_space<vmem>>, %arg6: memref<2x600xbf16, #tpu.memory_space<vmem>>, %arg7: memref<2x1xf32, #tpu.memory_space<vmem>>, %arg8: memref<2x16xf32, #tpu.memory_space<vmem>>) attributes {dimension_semantics = [#tpu.dimension_semantics<parallel>], iteration_bounds = array<i64: 1>, scalar_prefetch = 0 : i64, scratch_operands = 0 : i64, tpu.core_type = #tpu.core_type<tc>, window_params = [{transform_indices = @transform_0, window_bounds = array<i64: 16, 28>}, {pipeline_mode = #tpu.pipeline_mode<synchronous>, transform_indices = @transform_1, window_bounds = array<i64: 28, 800>}, {pipeline_mode = #tpu.pipeline_mode<synchronous>, transform_indices = @transform_2, window_bounds = array<i64: 1, 800>}, {pipeline_mode = #tpu.pipeline_mode<synchronous>, transform_indices = @transform_3, window_bounds = array<i64: 800, 600>}, {pipeline_mode = #tpu.pipeline_mode<synchronous>, transform_indices = @transform_4, window_bounds = array<i64: 1, 600>}, {pipeline_mode = #tpu.pipeline_mode<synchronous>, transform_indices = @transform_5, window_bounds = array<i64: 2, 600>}, {pipeline_mode = #tpu.pipeline_mode<synchronous>, transform_indices = @transform_6, window_bounds = array<i64: 2, 1>}, {transform_indices = @transform_7, window_bounds = array<i64: 2, 16>}]} {
    %c0 = arith.constant 0 : index
    %c0_0 = arith.constant 0 : index
    %0 = vector.load %arg1[%c0, %c0_0] : memref<16x28xf32, #tpu.memory_space<vmem>>, vector<16x28xf32>
    %c0_1 = arith.constant 0 : index
    %c0_2 = arith.constant 0 : index
    %1 = vector.load %arg2[%c0_1, %c0_2] : memref<28x800xf32, #tpu.memory_space<vmem>>, vector<28x800xf32>
    %cst = arith.constant dense<0.000000e+00> : vector<16x800xf32>
    %2 = tpu.matmul %0, %1, %cst {dimension_numbers = #tpu.dot_dimension_numbers<[1], [0], [0], [1], [0, 0, 1, 1], [], []>} : vector<16x28xf32>, vector<28x800xf32>, vector<16x800xf32> -> vector<16x800xf32>
    %c0_3 = arith.constant 0 : index
    %c0_4 = arith.constant 0 : index
    %3 = vector.load %arg3[%c0_3, %c0_4] : memref<1x800xf32, #tpu.memory_space<vmem>>, vector<1x800xf32>
    %4 = vector.broadcast %3 : vector<1x800xf32> to vector<16x800xf32>
    %5 = arith.addf %2, %4 : vector<16x800xf32>
    %cst_5 = arith.constant 0.000000e+00 : f32
    %6 = vector.broadcast %cst_5 : f32 to vector<16x800xf32>
    %7 = arith.maximumf %5, %6 : vector<16x800xf32>
    %8 = arith.truncf %7 : vector<16x800xf32> to vector<16x800xbf16>
    %c0_6 = arith.constant 0 : index
    %c0_7 = arith.constant 0 : index
    %9 = vector.load %arg4[%c0_6, %c0_7] : memref<800x600xbf16, #tpu.memory_space<vmem>>, vector<800x600xbf16>
    %cst_8 = arith.constant dense<0.000000e+00> : vector<16x600xf32>
    %10 = tpu.matmul %8, %9, %cst_8 {dimension_numbers = #tpu.dot_dimension_numbers<[1], [0], [0], [1], [0, 0, 1, 1], [], []>} : vector<16x800xbf16>, vector<800x600xbf16>, vector<16x600xf32> -> vector<16x600xf32>
    %c0_9 = arith.constant 0 : index
    %c0_10 = arith.constant 0 : index
    %11 = vector.load %arg5[%c0_9, %c0_10] : memref<1x600xf32, #tpu.memory_space<vmem>>, vector<1x600xf32>
    %12 = vector.broadcast %11 : vector<1x600xf32> to vector<16x600xf32>
    %13 = arith.addf %10, %12 : vector<16x600xf32>
    %cst_11 = arith.constant 0.000000e+00 : f32
    %14 = vector.broadcast %cst_11 : f32 to vector<16x600xf32>
    %15 = arith.maximumf %13, %14 : vector<16x600xf32>
    %c0_12 = arith.constant 0 : index
    %c0_13 = arith.constant 0 : index
    %16 = vector.load %arg6[%c0_12, %c0_13] : memref<2x600xbf16, #tpu.memory_space<vmem>>, vector<2x600xbf16>
    %17 = arith.truncf %15 : vector<16x600xf32> to vector<16x600xbf16>
    %cst_14 = arith.constant dense<0.000000e+00> : vector<2x16xf32>
    %18 = tpu.matmul %16, %17, %cst_14 {dimension_numbers = #tpu.dot_dimension_numbers<[1], [1], [0], [0], [0, 0, 1, 0], [], []>} : vector<2x600xbf16>, vector<16x600xbf16>, vector<2x16xf32> -> vector<2x16xf32>
    %c0_15 = arith.constant 0 : index
    %c0_16 = arith.constant 0 : index
    %19 = vector.load %arg7[%c0_15, %c0_16] : memref<2x1xf32, #tpu.memory_space<vmem>>, vector<2x1xf32>
    %20 = vector.broadcast %19 : vector<2x1xf32> to vector<2x16xf32>
    %21 = arith.addf %18, %20 : vector<2x16xf32>
    %22 = math.tanh %21 : vector<2x16xf32>
    %c0_17 = arith.constant 0 : index
    %c0_18 = arith.constant 0 : index
    %23 = vector.load %arg8[%c0_17, %c0_18] : memref<2x16xf32, #tpu.memory_space<vmem>>, vector<2x16xf32>
    tpu.vector_store %arg8[%c0_17, %c0_18], %22 {strides = array<i32>} : memref<2x16xf32, #tpu.memory_space<vmem>>, vector<2x16xf32>,
    return
  }
  func.func @transform_0(%arg0: i32) -> (i32, i32) {
    %c0_i32 = arith.constant 0 : i32
    %c0_i32_0 = arith.constant 0 : i32
    return %arg0, %c0_i32 : i32, i32
  }
  func.func @transform_1(%arg0: i32) -> (i32, i32) {
    %c0_i32 = arith.constant 0 : i32
    %c0_i32_0 = arith.constant 0 : i32
    %c0_i32_1 = arith.constant 0 : i32
    return %c0_i32, %c0_i32_0 : i32, i32
  }
  func.func @transform_2(%arg0: i32) -> (i32, i32) {
    %c0_i32 = arith.constant 0 : i32
    %c0_i32_0 = arith.constant 0 : i32
    %c0_i32_1 = arith.constant 0 : i32
    return %c0_i32, %c0_i32_0 : i32, i32
  }
  func.func @transform_3(%arg0: i32) -> (i32, i32) {
    %c0_i32 = arith.constant 0 : i32
    %c0_i32_0 = arith.constant 0 : i32
    %c0_i32_1 = arith.constant 0 : i32
    return %c0_i32, %c0_i32_0 : i32, i32
  }
  func.func @transform_4(%arg0: i32) -> (i32, i32) {
    %c0_i32 = arith.constant 0 : i32
    %c0_i32_0 = arith.constant 0 : i32
    %c0_i32_1 = arith.constant 0 : i32
    return %c0_i32, %c0_i32_0 : i32, i32
  }
  func.func @transform_5(%arg0: i32) -> (i32, i32) {
    %c0_i32 = arith.constant 0 : i32
    %c0_i32_0 = arith.constant 0 : i32
    %c0_i32_1 = arith.constant 0 : i32
    return %c0_i32, %c0_i32_0 : i32, i32
  }
  func.func @transform_6(%arg0: i32) -> (i32, i32) {
    %c0_i32 = arith.constant 0 : i32
    %c0_i32_0 = arith.constant 0 : i32
    %c0_i32_1 = arith.constant 0 : i32
    return %c0_i32, %c0_i32_0 : i32, i32
  }
  func.func @transform_7(%arg0: i32) -> (i32, i32) {
    %c0_i32 = arith.constant 0 : i32
    %c0_i32_0 = arith.constant 0 : i32
    return %c0_i32, %arg0 : i32, i32
  }
}

</mosaic_0001>

<llo_original>
// kernel: tpu_custom_call.1
$region0: #{tpu_custom_call.1}
  #allocation0 [shape = 'u32[]', space=smem, size = 0x4, offset = 0x4, fixed_abs, tag = 'smem constant byte address 0x4 - core index']
  #allocation1 [shape = 'u32[144,128]{1,0:T(1,128)}', space=vmem, size = 0x12000, scoped, tag = 'internal scratch']
  %s0 = inlined_call_operand.hbm [shape: f32[16,28], index: 0, kind: input, shape index: {}]
  %s1 = inlined_call_operand.hbm [shape: f32[28,800], index: 1, kind: input, shape index: {}]
  %s2 = inlined_call_operand.vmem [shape: f32[1,800], index: 2, kind: input, shape index: {}]
  %s3 = inlined_call_operand.hbm [shape: bf16[800,600], index: 3, kind: input, shape index: {}]
  %s4 = inlined_call_operand.vmem [shape: f32[1,600], index: 4, kind: input, shape index: {}]
  %s5 = inlined_call_operand.vmem [shape: bf16[2,600], index: 5, kind: input, shape index: {}]
  %s6 = inlined_call_operand.vmem [shape: f32[2,1], index: 6, kind: input, shape index: {}]
  %s7 = inlined_call_operand.hbm [shape: f32[2,16], index: 7, kind: output, shape index: {}]
  %s8 = sld [smem:[#allocation0]]
  $region50: #{tpu_custom_call.1} parent=0
    _
  %s10 = ssub.s32 1, %s8
  %s11 = scalar_select 0, %s10, %s8
  $region1: #{tpu_custom_call.1} parent=0
    #allocation2 [shape = 'u8[8192]{0}', space=vmem, size = 0x2000, scoped, tag = 'input window, operand 0, single buffered']
    #allocation3 [shape = 's32[1]{0}', space=sflag, size = 0x4, scoped, tag = 'scoped memory for tpu_custom_call.1']
    #allocation4 [shape = 's32[1]{0}', space=sflag, size = 0x4, scoped, tag = 'scoped memory for tpu_custom_call.1']
    #allocation5 [shape = 'u8[114688]{0}', space=vmem, size = 0x1c000, scoped, tag = 'input window, operand 1, single buffered']
    #allocation6 [shape = 's32[1]{0}', space=sflag, size = 0x4, scoped, tag = 'scoped memory for tpu_custom_call.1']
    #allocation7 [shape = 'u8[1024000]{0}', space=vmem, size = 0xfa000, scoped, tag = 'input window, operand 3, single buffered']
    #allocation8 [shape = 'u8[1024]{0}', space=vmem, size = 0x400, scoped, tag = 'output window, operand 0, single buffered']
    %12 = vsyncpa [#allocation3], 0
    %13 = vsyncpa [#allocation6], 0
    %14 = vsyncpa [#allocation4], 0
    // Predicated region
    $region2: #{tpu_custom_call.1} parent=1 // pred_check
      _
    $region3: #{tpu_custom_call.1} parent=1 // pred_check_branch
      %16 = sbr.rel (0) target = $region5
    $region4: #{tpu_custom_call.1} parent=1 // pred_region
      %s18 = ssub.s32 256, 256
      %19 = vsyncadd [#allocation3], %s18
      %s20 = sshll.u32 [#allocation2], 4
      %s21 = int_to_ptr.vmem [resolvable:$true] %s20
      %26 = dma.hbm_to_vmem [thread:$0]  %s0, 256, %s21, [#allocation3], 128, 128, 8
    $region5: #{tpu_custom_call.1} parent=1 // pred_fallthru
      _
    // Predicated region
    $region6: #{tpu_custom_call.1} parent=1 // pred_check
      _
    $region7: #{tpu_custom_call.1} parent=1 // pred_check_branch
      %28 = sbr.rel (0) target = $region9
    $region8: #{tpu_custom_call.1} parent=1 // pred_region
      %s30 = ssub.s32 3584, 3584
      %31 = vsyncadd [#allocation6], %s30
      %s32 = sshll.u32 [#allocation5], 4
      %s33 = int_to_ptr.vmem [resolvable:$true] %s32
      %38 = dma.hbm_to_vmem [thread:$0]  %s1, 3584, %s33, [#allocation6], 896, 896, 56
    $region9: #{tpu_custom_call.1} parent=1 // pred_fallthru
      _
    // Predicated region
    $region10: #{tpu_custom_call.1} parent=1 // pred_check
      _
    $region11: #{tpu_custom_call.1} parent=1 // pred_check_branch
      %40 = sbr.rel (0) target = $region13
    $region12: #{tpu_custom_call.1} parent=1 // pred_region
      _
    $region13: #{tpu_custom_call.1} parent=1 // pred_fallthru
      _
    // Predicated region
    $region14: #{tpu_custom_call.1} parent=1 // pred_check
      _
    $region15: #{tpu_custom_call.1} parent=1 // pred_check_branch
      %42 = sbr.rel (0) target = $region17
    $region16: #{tpu_custom_call.1} parent=1 // pred_region
      %s44 = ssub.s32 32000, 32000
      %45 = vsyncadd [#allocation6], %s44
      %s46 = sshll.u32 [#allocation7], 4
      %s47 = int_to_ptr.vmem [resolvable:$true] %s46
      %52 = dma.hbm_to_vmem [thread:$0]  %s3, 32000, %s47, [#allocation6], 320, 320, 20
    $region17: #{tpu_custom_call.1} parent=1 // pred_fallthru
      _
    // Predicated region
    $region18: #{tpu_custom_call.1} parent=1 // pred_check
      _
    $region19: #{tpu_custom_call.1} parent=1 // pred_check_branch
      %54 = sbr.rel (0) target = $region21
    $region20: #{tpu_custom_call.1} parent=1 // pred_region
      _
    $region21: #{tpu_custom_call.1} parent=1 // pred_fallthru
      _
    // Predicated region
    $region22: #{tpu_custom_call.1} parent=1 // pred_check
      _
    $region23: #{tpu_custom_call.1} parent=1 // pred_check_branch
      %56 = sbr.rel (0) target = $region25
    $region24: #{tpu_custom_call.1} parent=1 // pred_region
      _
    $region25: #{tpu_custom_call.1} parent=1 // pred_fallthru
      _
    // Predicated region
    $region26: #{tpu_custom_call.1} parent=1 // pred_check
      _
    $region27: #{tpu_custom_call.1} parent=1 // pred_check_branch
      %58 = sbr.rel (0) target = $region29
    $region28: #{tpu_custom_call.1} parent=1 // pred_region
      _
    $region29: #{tpu_custom_call.1} parent=1 // pred_fallthru
      _
    // Predicated region
    $region30: #{tpu_custom_call.1} parent=1 // pred_check
      _
    $region31: #{tpu_custom_call.1} parent=1 // pred_check_branch
      %60 = sbr.rel (0) target = $region33
    $region32: #{tpu_custom_call.1} parent=1 // pred_region
      %61 = dma.done [#allocation3], 256
    $region33: #{tpu_custom_call.1} parent=1 // pred_fallthru
      _
    // Predicated region
    $region34: #{tpu_custom_call.1} parent=1 // pred_check
      _
    $region35: #{tpu_custom_call.1} parent=1 // pred_check_branch
      %63 = sbr.rel (0) target = $region37
    $region36: #{tpu_custom_call.1} parent=1 // pred_region
      %64 = dma.done [#allocation6], 3584
    $region37: #{tpu_custom_call.1} parent=1 // pred_fallthru
      _
    // Predicated region
    $region38: #{tpu_custom_call.1} parent=1 // pred_check
      _
    $region39: #{tpu_custom_call.1} parent=1 // pred_check_branch
      %66 = sbr.rel (0) target = $region41
    $region40: #{tpu_custom_call.1} parent=1 // pred_region
      %67 = dma.done [#allocation6], 32000
    $region41: #{tpu_custom_call.1} parent=1 // pred_fallthru
      _
    %v69 = vld [vmem:[#allocation2] sm:$0xff]
    %v70 = vld [vmem:[#allocation2 + $0x8] sm:$0xff]
    %v71 = vld [vmem:[#allocation5] sm:$0xff]
    %v72 = vld [vmem:[#allocation5 + $0x8] sm:$0xff]
    %v73 = vld [vmem:[#allocation5 + $0x10] sm:$0xff]
    %v74 = vld [vmem:[#allocation5 + $0x18] sm:$0xff]
    %v75 = vld [vmem:[#allocation5 + $0x20] sm:$0xff]
    %v76 = vld [vmem:[#allocation5 + $0x28] sm:$0xff]
    %v77 = vld [vmem:[#allocation5 + $0x30] sm:$0xff]
    %v78 = vld [vmem:[#allocation5 + $0x38] sm:$0xff]
    %v79 = vld [vmem:[#allocation5 + $0x40] sm:$0xff]
    %v80 = vld [vmem:[#allocation5 + $0x48] sm:$0xff]
    %v81 = vld [vmem:[#allocation5 + $0x50] sm:$0xff]
    %v82 = vld [vmem:[#allocation5 + $0x58] sm:$0xff]
    %v83 = vld [vmem:[#allocation5 + $0x60] sm:$0xff]
    %v84 = vld [vmem:[#allocation5 + $0x68] sm:$0xff]
    %v85 = vld [vmem:[#allocation5 + $0x70] sm:$0xff]
    %v86 = vld [vmem:[#allocation5 + $0x78] sm:$0xff]
    %v87 = vld [vmem:[#allocation5 + $0x80] sm:$0xff]
    %v88 = vld [vmem:[#allocation5 + $0x88] sm:$0xff]
    %v89 = vld [vmem:[#allocation5 + $0x90] sm:$0xff]
    %v90 = vld [vmem:[#allocation5 + $0x98] sm:$0xff]
    %v91 = vld [vmem:[#allocation5 + $0xa0] sm:$0xff]
    %v92 = vld [vmem:[#allocation5 + $0xa8] sm:$0xf]
    %v93 = vld [vmem:[#allocation5 + $0xb0] sm:$0xf]
    %v94 = vld [vmem:[#allocation5 + $0xb8] sm:$0xf]
    %v95 = vld [vmem:[#allocation5 + $0xc0] sm:$0xf]
    %v96 = vld [vmem:[#allocation5 + $0xc8] sm:$0xf]
    %v97 = vld [vmem:[#allocation5 + $0xd0] sm:$0xf]
    %v98 = vld [vmem:[#allocation5 + $0xd8] sm:$0xf]
    %v99 = vld [vmem:[%s2] sm:$0x7f]
    %v101 = vlaneseq
    %v102 = vshrl.u32 %v101, 7
    %v103 = vsub.s32 0, %v102
    %v104 = vrot.slane %v99, %v103
    %v105 = vlaneseq
    %v106 = vshrl.u32 %v105, 7
    %v107 = vsub.s32 1, %v106
    %v108 = vrot.slane %v99, %v107
    %v109 = vlaneseq
    %v110 = vshrl.u32 %v109, 7
    %v111 = vsub.s32 2, %v110
    %v112 = vrot.slane %v99, %v111
    %v113 = vlaneseq
    %v114 = vshrl.u32 %v113, 7
    %v115 = vsub.s32 3, %v114
    %v116 = vrot.slane %v99, %v115
    %v117 = vlaneseq
    %v118 = vshrl.u32 %v117, 7
    %v119 = vsub.s32 4, %v118
    %v120 = vrot.slane %v99, %v119
    %v121 = vlaneseq
    %v122 = vshrl.u32 %v121, 7
    %v123 = vsub.s32 5, %v122
    %v124 = vrot.slane %v99, %v123
    %v125 = vlaneseq
    %v126 = vshrl.u32 %v125, 7
    %v127 = vsub.s32 6, %v126
    %v128 = vrot.slane %v99, %v127
    %vm136 = vcmask 228352
    %v138 = vsel %vm136, %v69, 0
    %v141 = vsel %vm136, %v70, 0
    %vm143 = vcmask 1043456
    %v145 = vsel %vm143, %v92, 0
    %v148 = vsel %vm143, %v93, 0
    %v151 = vsel %vm143, %v94, 0
    %v154 = vsel %vm143, %v95, 0
    %v157 = vsel %vm143, %v96, 0
    %v160 = vsel %vm143, %v97, 0
    %v163 = vsel %vm143, %v98, 0
    %165 = vmatprep.subr.mxu0 %v72
    %166 = vmatpush1.msra.mxu0 %v71
    %167 = vmatprep.subr.mxu0 %v79
    %168 = vmatpush1.msra.mxu0 %v78
    %169 = vmatprep.subr.mxu0 %v86
    %170 = vmatpush1.msra.mxu0 %v85
    %171 = vmatprep.subr.mxu0 %v148
    %172 = vmatpush1.msra.mxu0 %v145
    %173 = vmatprep.subr.mxu0 0.0
    %174 = vmatpush1.msra.mxu0 0.0
    %175 = vmatprep.subr.mxu0 0.0
    %176 = vmatpush1.msra.mxu0 0.0
    %177 = vmatprep.subr.mxu0 0.0
    %178 = vmatpush1.msra.mxu0 0.0
    %179 = vmatprep.subr.mxu0 0.0
    %180 = vmatpush1.msra.mxu0 0.0
    %181 = vmatprep.subr.mxu0 0.0
    %182 = vmatpush1.msra.mxu0 0.0
    %183 = vmatprep.subr.mxu0 0.0
    %184 = vmatpush1.msra.mxu0 0.0
    %185 = vmatprep.subr.mxu0 0.0
    %186 = vmatpush1.msra.mxu0 0.0
    %187 = vmatprep.subr.mxu0 0.0
    %188 = vmatpush1.msra.mxu0 0.0
    %189 = vmatprep.subr.mxu0 0.0
    %190 = vmatpush1.msra.mxu0 0.0
    %191 = vmatprep.subr.mxu0 0.0
    %192 = vmatpush1.msra.mxu0 0.0
    %193 = vmatprep.subr.mxu0 0.0
    %194 = vmatpush1.msra.mxu0 0.0
    %195 = vmatprep.subr.mxu0 0.0
    %196 = vmatpush1.msra.mxu0 0.0
    %197 = vmatprep.subr.mxu0 0.0
    %198 = vmatpush1.msra.mxu0 0.0
    %199 = vmatprep.subr.mxu0 0.0
    %200 = vmatpush1.msra.mxu0 0.0
    %201 = vmatprep.subr.mxu0 0.0
    %202 = vmatpush1.msra.mxu0 0.0
    %203 = vmatprep.subr.mxu0 0.0
    %204 = vmatpush1.msra.mxu0 0.0
    %205 = vmatprep.subr.mxu0 0.0
    %206 = vmatpush1.msra.mxu0 0.0
    %207 = vmatprep.subr.mxu0 0.0
    %208 = vmatpush1.msra.mxu0 0.0
    %209 = vmatprep.subr.mxu0 0.0
    %210 = vmatpush1.msra.mxu0 0.0
    %211 = vmatprep.subr.mxu0 0.0
    %212 = vmatpush1.msra.mxu0 0.0
    %213 = vmatprep.subr.mxu0 0.0
    %214 = vmatpush1.msra.mxu0 0.0
    %215 = vmatprep.subr.mxu0 0.0
    %216 = vmatpush1.msra.mxu0 0.0
    %217 = vmatprep.subr.mxu0 0.0
    %218 = vmatpush1.msra.mxu0 0.0
    %219 = vmatprep.subr.mxu0 0.0
    %220 = vmatpush1.msra.mxu0 0.0
    %221 = vmatprep.subr.mxu0 0.0
    %222 = vmatpush1.msra.mxu0 0.0
    %223 = vmatprep.subr.mxu0 0.0
    %224 = vmatpush1.msra.mxu0 0.0
    %225 = vmatprep.subr.mxu0 0.0
    %226 = vmatpush1.msra.mxu0 0.0
    %227 = vmatprep.subr.mxu0 0.0
    %228 = vmatpush1.msra.mxu0 0.0
    %229 = vmatprep.mubr.f32.mxu0 0.0
    %230 = vmatmul.mubr.f32.gmra.mrb[0].mxu0 %v138
    %v231 = vpop.f32.mrb[0].mxu0
    %v232 = vadd.f32 %v104, %v231
    %v233 = vpop.f32.mrb[0].mxu0
    %v234 = vadd.f32 %v108, %v233
    %235 = vmatprep.mubr.f32.mxu0 0.0
    %236 = vmatmul.mubr.f32.gmra.mrb[0].mxu0 %v141
    %v237 = vpop.f32.mrb[0].mxu0
    %v238 = vadd.f32 %v104, %v237
    %v239 = vpop.f32.mrb[0].mxu0
    %v240 = vadd.f32 %v108, %v239
    %241 = vdwg.mxu0
    %242 = vmatprep.subr.mxu0 %v74
    %243 = vmatpush1.msra.mxu0 %v73
    %244 = vmatprep.subr.mxu0 %v81
    %245 = vmatpush1.msra.mxu0 %v80
    %246 = vmatprep.subr.mxu0 %v88
    %247 = vmatpush1.msra.mxu0 %v87
    %248 = vmatprep.subr.mxu0 %v154
    %249 = vmatpush1.msra.mxu0 %v151
    %250 = vmatprep.subr.mxu0 0.0
    %251 = vmatpush1.msra.mxu0 0.0
    %252 = vmatprep.subr.mxu0 0.0
    %253 = vmatpush1.msra.mxu0 0.0
    %254 = vmatprep.subr.mxu0 0.0
    %255 = vmatpush1.msra.mxu0 0.0
    %256 = vmatprep.subr.mxu0 0.0
    %257 = vmatpush1.msra.mxu0 0.0
    %258 = vmatprep.subr.mxu0 0.0
    %259 = vmatpush1.msra.mxu0 0.0
    %260 = vmatprep.subr.mxu0 0.0
    %261 = vmatpush1.msra.mxu0 0.0
    %262 = vmatprep.subr.mxu0 0.0
    %263 = vmatpush1.msra.mxu0 0.0
    %264 = vmatprep.subr.mxu0 0.0
    %265 = vmatpush1.msra.mxu0 0.0
    %266 = vmatprep.subr.mxu0 0.0
    %267 = vmatpush1.msra.mxu0 0.0
    %268 = vmatprep.subr.mxu0 0.0
    %269 = vmatpush1.msra.mxu0 0.0
    %270 = vmatprep.subr.mxu0 0.0
    %271 = vmatpush1.msra.mxu0 0.0
    %272 = vmatprep.subr.mxu0 0.0
    %273 = vmatpush1.msra.mxu0 0.0
    %274 = vmatprep.subr.mxu0 0.0
    %275 = vmatpush1.msra.mxu0 0.0
    %276 = vmatprep.subr.mxu0 0.0
    %277 = vmatpush1.msra.mxu0 0.0
    %278 = vmatprep.subr.mxu0 0.0
    %279 = vmatpush1.msra.mxu0 0.0
    %280 = vmatprep.subr.mxu0 0.0
    %281 = vmatpush1.msra.mxu0 0.0
    %282 = vmatprep.subr.mxu0 0.0
    %283 = vmatpush1.msra.mxu0 0.0
    %284 = vmatprep.subr.mxu0 0.0
    %285 = vmatpush1.msra.mxu0 0.0
    %286 = vmatprep.subr.mxu0 0.0
    %287 = vmatpush1.msra.mxu0 0.0
    %288 = vmatprep.subr.mxu0 0.0
    %289 = vmatpush1.msra.mxu0 0.0
    %290 = vmatprep.subr.mxu0 0.0
    %291 = vmatpush1.msra.mxu0 0.0
    %292 = vmatprep.subr.mxu0 0.0
    %293 = vmatpush1.msra.mxu0 0.0
    %294 = vmatprep.subr.mxu0 0.0
    %295 = vmatpush1.msra.mxu0 0.0
    %296 = vmatprep.subr.mxu0 0.0
    %297 = vmatpush1.msra.mxu0 0.0
    %298 = vmatprep.subr.mxu0 0.0
    %299 = vmatpush1.msra.mxu0 0.0
    %300 = vmatprep.subr.mxu0 0.0
    %301 = vmatpush1.msra.mxu0 0.0
    %302 = vmatprep.subr.mxu0 0.0
    %303 = vmatpush1.msra.mxu0 0.0
    %304 = vmatprep.subr.mxu0 0.0
    %305 = vmatpush1.msra.mxu0 0.0
    %306 = vmatprep.mubr.f32.mxu0 0.0
    %307 = vmatmul.mubr.f32.gmra.mrb[0].mxu0 %v138
    %v308 = vpop.f32.mrb[0].mxu0
    %v309 = vadd.f32 %v112, %v308
    %v310 = vpop.f32.mrb[0].mxu0
    %v311 = vadd.f32 %v116, %v310
    %312 = vmatprep.mubr.f32.mxu0 0.0
    %313 = vmatmul.mubr.f32.gmra.mrb[0].mxu0 %v141
    %v314 = vpop.f32.mrb[0].mxu0
    %v315 = vadd.f32 %v112, %v314
    %v316 = vpop.f32.mrb[0].mxu0
    %v317 = vadd.f32 %v116, %v316
    %318 = vdwg.mxu0
    %319 = vmatprep.subr.mxu0 %v76
    %320 = vmatpush1.msra.mxu0 %v75
    %321 = vmatprep.subr.mxu0 %v83
    %322 = vmatpush1.msra.mxu0 %v82
    %323 = vmatprep.subr.mxu0 %v90
    %324 = vmatpush1.msra.mxu0 %v89
    %325 = vmatprep.subr.mxu0 %v160
    %326 = vmatpush1.msra.mxu0 %v157
    %327 = vmatprep.subr.mxu0 0.0
    %328 = vmatpush1.msra.mxu0 0.0
    %329 = vmatprep.subr.mxu0 0.0
    %330 = vmatpush1.msra.mxu0 0.0
    %331 = vmatprep.subr.mxu0 0.0
    %332 = vmatpush1.msra.mxu0 0.0
    %333 = vmatprep.subr.mxu0 0.0
    %334 = vmatpush1.msra.mxu0 0.0
    %335 = vmatprep.subr.mxu0 0.0
    %336 = vmatpush1.msra.mxu0 0.0
    %337 = vmatprep.subr.mxu0 0.0
    %338 = vmatpush1.msra.mxu0 0.0
    %339 = vmatprep.subr.mxu0 0.0
    %340 = vmatpush1.msra.mxu0 0.0
    %341 = vmatprep.subr.mxu0 0.0
    %342 = vmatpush1.msra.mxu0 0.0
    %343 = vmatprep.subr.mxu0 0.0
    %344 = vmatpush1.msra.mxu0 0.0
    %345 = vmatprep.subr.mxu0 0.0
    %346 = vmatpush1.msra.mxu0 0.0
    %347 = vmatprep.subr.mxu0 0.0
    %348 = vmatpush1.msra.mxu0 0.0
    %349 = vmatprep.subr.mxu0 0.0
    %350 = vmatpush1.msra.mxu0 0.0
    %351 = vmatprep.subr.mxu0 0.0
    %352 = vmatpush1.msra.mxu0 0.0
    %353 = vmatprep.subr.mxu0 0.0
    %354 = vmatpush1.msra.mxu0 0.0
    %355 = vmatprep.subr.mxu0 0.0
    %356 = vmatpush1.msra.mxu0 0.0
    %357 = vmatprep.subr.mxu0 0.0
    %358 = vmatpush1.msra.mxu0 0.0
    %359 = vmatprep.subr.mxu0 0.0
    %360 = vmatpush1.msra.mxu0 0.0
    %361 = vmatprep.subr.mxu0 0.0
    %362 = vmatpush1.msra.mxu0 0.0
    %363 = vmatprep.subr.mxu0 0.0
    %364 = vmatpush1.msra.mxu0 0.0
    %365 = vmatprep.subr.mxu0 0.0
    %366 = vmatpush1.msra.mxu0 0.0
    %367 = vmatprep.subr.mxu0 0.0
    %368 = vmatpush1.msra.mxu0 0.0
    %369 = vmatprep.subr.mxu0 0.0
    %370 = vmatpush1.msra.mxu0 0.0
    %371 = vmatprep.subr.mxu0 0.0
    %372 = vmatpush1.msra.mxu0 0.0
    %373 = vmatprep.subr.mxu0 0.0
    %374 = vmatpush1.msra.mxu0 0.0
    %375 = vmatprep.subr.mxu0 0.0
    %376 = vmatpush1.msra.mxu0 0.0
    %377 = vmatprep.subr.mxu0 0.0
    %378 = vmatpush1.msra.mxu0 0.0
    %379 = vmatprep.subr.mxu0 0.0
    %380 = vmatpush1.msra.mxu0 0.0
    %381 = vmatprep.subr.mxu0 0.0
    %382 = vmatpush1.msra.mxu0 0.0
    %383 = vmatprep.mubr.f32.mxu0 0.0
    %384 = vmatmul.mubr.f32.gmra.mrb[0].mxu0 %v138
    %v385 = vpop.f32.mrb[0].mxu0
    %v386 = vadd.f32 %v120, %v385
    %v387 = vpop.f32.mrb[0].mxu0
    %v388 = vadd.f32 %v124, %v387
    %389 = vmatprep.mubr.f32.mxu0 0.0
    %390 = vmatmul.mubr.f32.gmra.mrb[0].mxu0 %v141
    %v391 = vpop.f32.mrb[0].mxu0
    %v392 = vadd.f32 %v120, %v391
    %v393 = vpop.f32.mrb[0].mxu0
    %v394 = vadd.f32 %v124, %v393
    %395 = vdwg.mxu0
    %396 = vmatprep.subr.mxu0 0.0
    %397 = vmatpush1.msra.mxu0 %v77
    %398 = vmatprep.subr.mxu0 0.0
    %399 = vmatpush1.msra.mxu0 %v84
    %400 = vmatprep.subr.mxu0 0.0
    %401 = vmatpush1.msra.mxu0 %v91
    %402 = vmatprep.subr.mxu0 0.0
    %403 = vmatpush1.msra.mxu0 %v163
    %404 = vmatprep.subr.mxu0 0.0
    %405 = vmatpush1.msra.mxu0 0.0
    %406 = vmatprep.subr.mxu0 0.0
    %407 = vmatpush1.msra.mxu0 0.0
    %408 = vmatprep.subr.mxu0 0.0
    %409 = vmatpush1.msra.mxu0 0.0
    %410 = vmatprep.subr.mxu0 0.0
    %411 = vmatpush1.msra.mxu0 0.0
    %412 = vmatprep.subr.mxu0 0.0
    %413 = vmatpush1.msra.mxu0 0.0
    %414 = vmatprep.subr.mxu0 0.0
    %415 = vmatpush1.msra.mxu0 0.0
    %416 = vmatprep.subr.mxu0 0.0
    %417 = vmatpush1.msra.mxu0 0.0
    %418 = vmatprep.subr.mxu0 0.0
    %419 = vmatpush1.msra.mxu0 0.0
    %420 = vmatprep.subr.mxu0 0.0
    %421 = vmatpush1.msra.mxu0 0.0
    %422 = vmatprep.subr.mxu0 0.0
    %423 = vmatpush1.msra.mxu0 0.0
    %424 = vmatprep.subr.mxu0 0.0
    %425 = vmatpush1.msra.mxu0 0.0
    %426 = vmatprep.subr.mxu0 0.0
    %427 = vmatpush1.msra.mxu0 0.0
    %428 = vmatprep.subr.mxu0 0.0
    %429 = vmatpush1.msra.mxu0 0.0
    %430 = vmatprep.subr.mxu0 0.0
    %431 = vmatpush1.msra.mxu0 0.0
    %432 = vmatprep.subr.mxu0 0.0
    %433 = vmatpush1.msra.mxu0 0.0
    %434 = vmatprep.subr.mxu0 0.0
    %435 = vmatpush1.msra.mxu0 0.0
    %436 = vmatprep.subr.mxu0 0.0
    %437 = vmatpush1.msra.mxu0 0.0
    %438 = vmatprep.subr.mxu0 0.0
    %439 = vmatpush1.msra.mxu0 0.0
    %440 = vmatprep.subr.mxu0 0.0
    %441 = vmatpush1.msra.mxu0 0.0
    %442 = vmatprep.subr.mxu0 0.0
    %443 = vmatpush1.msra.mxu0 0.0
    %444 = vmatprep.subr.mxu0 0.0
    %445 = vmatpush1.msra.mxu0 0.0
    %446 = vmatprep.subr.mxu0 0.0
    %447 = vmatpush1.msra.mxu0 0.0
    %448 = vmatprep.subr.mxu0 0.0
    %449 = vmatpush1.msra.mxu0 0.0
    %450 = vmatprep.subr.mxu0 0.0
    %451 = vmatpush1.msra.mxu0 0.0
    %452 = vmatprep.subr.mxu0 0.0
    %453 = vmatpush1.msra.mxu0 0.0
    %454 = vmatprep.subr.mxu0 0.0
    %455 = vmatpush1.msra.mxu0 0.0
    %456 = vmatprep.subr.mxu0 0.0
    %457 = vmatpush1.msra.mxu0 0.0
    %458 = vmatprep.subr.mxu0 0.0
    %459 = vmatpush1.msra.mxu0 0.0
    %460 = vmatprep.mubr.f32.mxu0 0.0
    %461 = vmatmul.mubr.f32.gmra.mrb[0].mxu0 %v138
    %v462 = vpop.f32.mrb[0].mxu0
    %v463 = vadd.f32 %v128, %v462
    %v464 = vpop.f32.mrb[0].mxu0
    %465 = vmatprep.mubr.f32.mxu0 0.0
    %466 = vmatmul.mubr.f32.gmra.mrb[0].mxu0 %v141
    %v467 = vpop.f32.mrb[0].mxu0
    %v468 = vadd.f32 %v128, %v467
    %v469 = vpop.f32.mrb[0].mxu0
    %470 = vdwg.mxu0
    %v471 = vmax.f32 %v232, 0.0
    %v472 = vmax.f32 %v234, 0.0
    %v473 = vmax.f32 %v309, 0.0
    %v474 = vmax.f32 %v311, 0.0
    %v475 = vmax.f32 %v386, 0.0
    %v476 = vmax.f32 %v388, 0.0
    %v477 = vmax.f32 %v463, 0.0
    %v478 = vmax.f32 %v238, 0.0
    %v479 = vmax.f32 %v240, 0.0
    %v480 = vmax.f32 %v315, 0.0
    %v481 = vmax.f32 %v317, 0.0
    %v482 = vmax.f32 %v392, 0.0
    %v483 = vmax.f32 %v394, 0.0
    %v484 = vmax.f32 %v468, 0.0
    %v485 = vpack.c.bf16 %v478, %v471
    %v486 = vpack.c.bf16 %v479, %v472
    %v487 = vpack.c.bf16 %v480, %v473
    %v488 = vpack.c.bf16 %v481, %v474
    %v489 = vpack.c.bf16 %v482, %v475
    %v490 = vpack.c.bf16 %v483, %v476
    %v491 = vpack.c.bf16 %v484, %v477
    %v492 = vld [vmem:[#allocation7] sm:$0xff]
    %v493 = vld [vmem:[#allocation7 + $0x8] sm:$0xff]
    %v494 = vld [vmem:[#allocation7 + $0x10] sm:$0xf]
    %v495 = vld [vmem:[#allocation7 + $0x14] sm:$0xff]
    %v496 = vld [vmem:[#allocation7 + $0x1c] sm:$0xff]
    %v497 = vld [vmem:[#allocation7 + $0x24] sm:$0xf]
    %v498 = vld [vmem:[#allocation7 + $0x28] sm:$0xff]
    %v499 = vld [vmem:[#allocation7 + $0x30] sm:$0xff]
    %v500 = vld [vmem:[#allocation7 + $0x38] sm:$0xf]
    %v501 = vld [vmem:[#allocation7 + $0x3c] sm:$0xff]
    %v502 = vld [vmem:[#allocation7 + $0x44] sm:$0xff]
    %v503 = vld [vmem:[#allocation7 + $0x4c] sm:$0xf]
    %v504 = vld [vmem:[#allocation7 + $0x50] sm:$0xff]
    %v505 = vld [vmem:[#allocation7 + $0x58] sm:$0xff]
    %v506 = vld [vmem:[#allocation7 + $0x60] sm:$0xf]
    %v507 = vld [vmem:[#allocation7 + $0x64] sm:$0xff]
    %v508 = vld [vmem:[#allocation7 + $0x6c] sm:$0xff]
    %v509 = vld [vmem:[#allocation7 + $0x74] sm:$0xf]
    %v510 = vld [vmem:[#allocation7 + $0x78] sm:$0xff]
    %v511 = vld [vmem:[#allocation7 + $0x80] sm:$0xff]
    %v512 = vld [vmem:[#allocation7 + $0x88] sm:$0xf]
    %v513 = vld [vmem:[#allocation7 + $0x8c] sm:$0xff]
    %v514 = vld [vmem:[#allocation7 + $0x94] sm:$0xff]
    %v515 = vld [vmem:[#allocation7 + $0x9c] sm:$0xf]
    %v516 = vld [vmem:[#allocation7 + $0xa0] sm:$0xff]
    %v517 = vld [vmem:[#allocation7 + $0xa8] sm:$0xff]
    %v518 = vld [vmem:[#allocation7 + $0xb0] sm:$0xf]
    %v519 = vld [vmem:[#allocation7 + $0xb4] sm:$0xff]
    %v520 = vld [vmem:[#allocation7 + $0xbc] sm:$0xff]
    %v521 = vld [vmem:[#allocation7 + $0xc4] sm:$0xf]
    %v522 = vld [vmem:[#allocation7 + $0xc8] sm:$0xff]
    %v523 = vld [vmem:[#allocation7 + $0xd0] sm:$0xff]
    %v524 = vld [vmem:[#allocation7 + $0xd8] sm:$0xf]
    %v525 = vld [vmem:[#allocation7 + $0xdc] sm:$0xff]
    %v526 = vld [vmem:[#allocation7 + $0xe4] sm:$0xff]
    %v527 = vld [vmem:[#allocation7 + $0xec] sm:$0xf]
    %v528 = vld [vmem:[#allocation7 + $0xf0] sm:$0xff]
    %v529 = vld [vmem:[#allocation7 + $0xf8] sm:$0xff]
    %v530 = vld [vmem:[#allocation7 + $0x100] sm:$0xf]
    %v531 = vld [vmem:[#allocation7 + $0x104] sm:$0xff]
    %v532 = vld [vmem:[#allocation7 + $0x10c] sm:$0xff]
    %v533 = vld [vmem:[#allocation7 + $0x114] sm:$0xf]
    %v534 = vld [vmem:[#allocation7 + $0x118] sm:$0xff]
    %v535 = vld [vmem:[#allocation7 + $0x120] sm:$0xff]
    %v536 = vld [vmem:[#allocation7 + $0x128] sm:$0xf]
    %v537 = vld [vmem:[#allocation7 + $0x12c] sm:$0xff]
    %v538 = vld [vmem:[#allocation7 + $0x134] sm:$0xff]
    %v539 = vld [vmem:[#allocation7 + $0x13c] sm:$0xf]
    %v540 = vld [vmem:[#allocation7 + $0x140] sm:$0xff]
    %v541 = vld [vmem:[#allocation7 + $0x148] sm:$0xff]
    %v542 = vld [vmem:[#allocation7 + $0x150] sm:$0xf]
    %v543 = vld [vmem:[#allocation7 + $0x154] sm:$0xff]
    %v544 = vld [vmem:[#allocation7 + $0x15c] sm:$0xff]
    %v545 = vld [vmem:[#allocation7 + $0x164] sm:$0xf]
    %v546 = vld [vmem:[#allocation7 + $0x168] sm:$0xff]
    %v547 = vld [vmem:[#allocation7 + $0x170] sm:$0xff]
    %v548 = vld [vmem:[#allocation7 + $0x178] sm:$0xf]
    %v549 = vld [vmem:[#allocation7 + $0x17c] sm:$0xff]
    %v550 = vld [vmem:[#allocation7 + $0x184] sm:$0xff]
    %v551 = vld [vmem:[#allocation7 + $0x18c] sm:$0xf]
    %v552 = vld [vmem:[#allocation7 + $0x190] sm:$0xff]
    %v553 = vld [vmem:[#allocation7 + $0x198] sm:$0xff]
    %v554 = vld [vmem:[#allocation7 + $0x1a0] sm:$0xf]
    %v555 = vld [vmem:[#allocation7 + $0x1a4] sm:$0xff]
    %v556 = vld [vmem:[#allocation7 + $0x1ac] sm:$0xff]
    %v557 = vld [vmem:[#allocation7 + $0x1b4] sm:$0xf]
    %v558 = vld [vmem:[#allocation7 + $0x1b8] sm:$0xff]
    %v559 = vld [vmem:[#allocation7 + $0x1c0] sm:$0xff]
    %v560 = vld [vmem:[#allocation7 + $0x1c8] sm:$0xf]
    %v561 = vld [vmem:[#allocation7 + $0x1cc] sm:$0xff]
    %v562 = vld [vmem:[#allocation7 + $0x1d4] sm:$0xff]
    %v563 = vld [vmem:[#allocation7 + $0x1dc] sm:$0xf]
    %v564 = vld [vmem:[#allocation7 + $0x1e0] sm:$0xff]
    %v565 = vld [vmem:[#allocation7 + $0x1e8] sm:$0xff]
    %v566 = vld [vmem:[#allocation7 + $0x1f0] sm:$0xf]
    %v567 = vld [vmem:[#allocation7 + $0x1f4] sm:$0xff]
    %v568 = vld [vmem:[#allocation7 + $0x1fc] sm:$0xff]
    %v569 = vld [vmem:[#allocation7 + $0x204] sm:$0xf]
    %v570 = vld [vmem:[#allocation7 + $0x208] sm:$0xff]
    %v571 = vld [vmem:[#allocation7 + $0x210] sm:$0xff]
    %v572 = vld [vmem:[#allocation7 + $0x218] sm:$0xf]
    %v573 = vld [vmem:[#allocation7 + $0x21c] sm:$0xff]
    %v574 = vld [vmem:[#allocation7 + $0x224] sm:$0xff]
    %v575 = vld [vmem:[#allocation7 + $0x22c] sm:$0xf]
    %v576 = vld [vmem:[#allocation7 + $0x230] sm:$0xff]
    %v577 = vld [vmem:[#allocation7 + $0x238] sm:$0xff]
    %v578 = vld [vmem:[#allocation7 + $0x240] sm:$0xf]
    %v579 = vld [vmem:[#allocation7 + $0x244] sm:$0xff]
    %v580 = vld [vmem:[#allocation7 + $0x24c] sm:$0xff]
    %v581 = vld [vmem:[#allocation7 + $0x254] sm:$0xf]
    %v582 = vld [vmem:[#allocation7 + $0x258] sm:$0xff]
    %v583 = vld [vmem:[#allocation7 + $0x260] sm:$0xff]
    %v584 = vld [vmem:[#allocation7 + $0x268] sm:$0xf]
    %v585 = vld [vmem:[#allocation7 + $0x26c] sm:$0xff]
    %v586 = vld [vmem:[#allocation7 + $0x274] sm:$0xff]
    %v587 = vld [vmem:[#allocation7 + $0x27c] sm:$0xf]
    %v588 = vld [vmem:[#allocation7 + $0x280] sm:$0xff]
    %v589 = vld [vmem:[#allocation7 + $0x288] sm:$0xff]
    %v590 = vld [vmem:[#allocation7 + $0x290] sm:$0xf]
    %v591 = vld [vmem:[#allocation7 + $0x294] sm:$0xff]
    %v592 = vld [vmem:[#allocation7 + $0x29c] sm:$0xff]
    %v593 = vld [vmem:[#allocation7 + $0x2a4] sm:$0xf]
    %v594 = vld [vmem:[#allocation7 + $0x2a8] sm:$0xff]
    %v595 = vld [vmem:[#allocation7 + $0x2b0] sm:$0xff]
    %v596 = vld [vmem:[#allocation7 + $0x2b8] sm:$0xf]
    %v597 = vld [vmem:[#allocation7 + $0x2bc] sm:$0xff]
    %v598 = vld [vmem:[#allocation7 + $0x2c4] sm:$0xff]
    %v599 = vld [vmem:[#allocation7 + $0x2cc] sm:$0xf]
    %v600 = vld [vmem:[#allocation7 + $0x2d0] sm:$0xff]
    %v601 = vld [vmem:[#allocation7 + $0x2d8] sm:$0xff]
    %v602 = vld [vmem:[#allocation7 + $0x2e0] sm:$0xf]
    %v603 = vld [vmem:[#allocation7 + $0x2e4] sm:$0xff]
    %v604 = vld [vmem:[#allocation7 + $0x2ec] sm:$0xff]
    %v605 = vld [vmem:[#allocation7 + $0x2f4] sm:$0xf]
    %v606 = vld [vmem:[#allocation7 + $0x2f8] sm:$0xff]
    %v607 = vld [vmem:[#allocation7 + $0x300] sm:$0xff]
    %v608 = vld [vmem:[#allocation7 + $0x308] sm:$0xf]
    %v609 = vld [vmem:[#allocation7 + $0x30c] sm:$0xff]
    %v610 = vld [vmem:[#allocation7 + $0x314] sm:$0xff]
    %v611 = vld [vmem:[#allocation7 + $0x31c] sm:$0xf]
    %v612 = vld [vmem:[#allocation7 + $0x320] sm:$0xff]
    %v613 = vld [vmem:[#allocation7 + $0x328] sm:$0xff]
    %v614 = vld [vmem:[#allocation7 + $0x330] sm:$0xf]
    %v615 = vld [vmem:[#allocation7 + $0x334] sm:$0xff]
    %v616 = vld [vmem:[#allocation7 + $0x33c] sm:$0xff]
    %v617 = vld [vmem:[#allocation7 + $0x344] sm:$0xf]
    %v618 = vld [vmem:[#allocation7 + $0x348] sm:$0xff]
    %v619 = vld [vmem:[#allocation7 + $0x350] sm:$0xff]
    %v620 = vld [vmem:[#allocation7 + $0x358] sm:$0xf]
    %v621 = vld [vmem:[#allocation7 + $0x35c] sm:$0xff]
    %v622 = vld [vmem:[#allocation7 + $0x364] sm:$0xff]
    %v623 = vld [vmem:[#allocation7 + $0x36c] sm:$0xf]
    %v624 = vld [vmem:[#allocation7 + $0x370] sm:$0xff]
    %v625 = vld [vmem:[#allocation7 + $0x378] sm:$0xff]
    %v626 = vld [vmem:[#allocation7 + $0x380] sm:$0xf]
    %v627 = vld [vmem:[#allocation7 + $0x384] sm:$0xff]
    %v628 = vld [vmem:[#allocation7 + $0x38c] sm:$0xff]
    %v629 = vld [vmem:[#allocation7 + $0x394] sm:$0xf]
    %v630 = vld [vmem:[#allocation7 + $0x398] sm:$0xff]
    %v631 = vld [vmem:[#allocation7 + $0x3a0] sm:$0xff]
    %v632 = vld [vmem:[#allocation7 + $0x3a8] sm:$0xf]
    %v633 = vld [vmem:[#allocation7 + $0x3ac] sm:$0xff]
    %v634 = vld [vmem:[#allocation7 + $0x3b4] sm:$0xff]
    %v635 = vld [vmem:[#allocation7 + $0x3bc] sm:$0xf]
    %v636 = vld [vmem:[#allocation7 + $0x3c0] sm:$0xff]
    %v637 = vld [vmem:[#allocation7 + $0x3c8] sm:$0xff]
    %v638 = vld [vmem:[#allocation7 + $0x3d0] sm:$0xf]
    %v639 = vld [vmem:[#allocation7 + $0x3d4] sm:$0xff]
    %v640 = vld [vmem:[#allocation7 + $0x3dc] sm:$0xff]
    %v641 = vld [vmem:[#allocation7 + $0x3e4] sm:$0xf]
    %v642 = vld [vmem:[#allocation7 + $0x3e8] sm:$0xff]
    %v643 = vld [vmem:[#allocation7 + $0x3f0] sm:$0xff]
    %v644 = vld [vmem:[#allocation7 + $0x3f8] sm:$0xf]
    %v645 = vld [vmem:[#allocation7 + $0x3fc] sm:$0xff]
    %v646 = vld [vmem:[#allocation7 + $0x404] sm:$0xff]
    %v647 = vld [vmem:[#allocation7 + $0x40c] sm:$0xf]
    %v648 = vld [vmem:[#allocation7 + $0x410] sm:$0xff]
    %v649 = vld [vmem:[#allocation7 + $0x418] sm:$0xff]
    %v650 = vld [vmem:[#allocation7 + $0x420] sm:$0xf]
    %v651 = vld [vmem:[#allocation7 + $0x424] sm:$0xff]
    %v652 = vld [vmem:[#allocation7 + $0x42c] sm:$0xff]
    %v653 = vld [vmem:[#allocation7 + $0x434] sm:$0xf]
    %v654 = vld [vmem:[#allocation7 + $0x438] sm:$0xff]
    %v655 = vld [vmem:[#allocation7 + $0x440] sm:$0xff]
    %v656 = vld [vmem:[#allocation7 + $0x448] sm:$0xf]
    %v657 = vld [vmem:[#allocation7 + $0x44c] sm:$0xff]
    %v658 = vld [vmem:[#allocation7 + $0x454] sm:$0xff]
    %v659 = vld [vmem:[#allocation7 + $0x45c] sm:$0xf]
    %v660 = vld [vmem:[#allocation7 + $0x460] sm:$0xff]
    %v661 = vld [vmem:[#allocation7 + $0x468] sm:$0xff]
    %v662 = vld [vmem:[#allocation7 + $0x470] sm:$0xf]
    %v663 = vld [vmem:[#allocation7 + $0x474] sm:$0xff]
    %v664 = vld [vmem:[#allocation7 + $0x47c] sm:$0xff]
    %v665 = vld [vmem:[#allocation7 + $0x484] sm:$0xf]
    %v666 = vld [vmem:[#allocation7 + $0x488] sm:$0xff]
    %v667 = vld [vmem:[#allocation7 + $0x490] sm:$0xff]
    %v668 = vld [vmem:[#allocation7 + $0x498] sm:$0xf]
    %v669 = vld [vmem:[#allocation7 + $0x49c] sm:$0xff]
    %v670 = vld [vmem:[#allocation7 + $0x4a4] sm:$0xff]
    %v671 = vld [vmem:[#allocation7 + $0x4ac] sm:$0xf]
    %v672 = vld [vmem:[#allocation7 + $0x4b0] sm:$0xff]
    %v673 = vld [vmem:[#allocation7 + $0x4b8] sm:$0xff]
    %v674 = vld [vmem:[#allocation7 + $0x4c0] sm:$0xf]
    %v675 = vld [vmem:[#allocation7 + $0x4c4] sm:$0xff]
    %v676 = vld [vmem:[#allocation7 + $0x4cc] sm:$0xff]
    %v677 = vld [vmem:[#allocation7 + $0x4d4] sm:$0xf]
    %v678 = vld [vmem:[#allocation7 + $0x4d8] sm:$0xff]
    %v679 = vld [vmem:[#allocation7 + $0x4e0] sm:$0xff]
    %v680 = vld [vmem:[#allocation7 + $0x4e8] sm:$0xf]
    %v681 = vld [vmem:[#allocation7 + $0x4ec] sm:$0xff]
    %v682 = vld [vmem:[#allocation7 + $0x4f4] sm:$0xff]
    %v683 = vld [vmem:[#allocation7 + $0x4fc] sm:$0xf]
    %v684 = vld [vmem:[#allocation7 + $0x500] sm:$0xff]
    %v685 = vld [vmem:[#allocation7 + $0x508] sm:$0xff]
    %v686 = vld [vmem:[#allocation7 + $0x510] sm:$0xf]
    %v687 = vld [vmem:[#allocation7 + $0x514] sm:$0xff]
    %v688 = vld [vmem:[#allocation7 + $0x51c] sm:$0xff]
    %v689 = vld [vmem:[#allocation7 + $0x524] sm:$0xf]
    %v690 = vld [vmem:[#allocation7 + $0x528] sm:$0xff]
    %v691 = vld [vmem:[#allocation7 + $0x530] sm:$0xff]
    %v692 = vld [vmem:[#allocation7 + $0x538] sm:$0xf]
    %v693 = vld [vmem:[#allocation7 + $0x53c] sm:$0xff]
    %v694 = vld [vmem:[#allocation7 + $0x544] sm:$0xff]
    %v695 = vld [vmem:[#allocation7 + $0x54c] sm:$0xf]
    %v696 = vld [vmem:[#allocation7 + $0x550] sm:$0xff]
    %v697 = vld [vmem:[#allocation7 + $0x558] sm:$0xff]
    %v698 = vld [vmem:[#allocation7 + $0x560] sm:$0xf]
    %v699 = vld [vmem:[#allocation7 + $0x564] sm:$0xff]
    %v700 = vld [vmem:[#allocation7 + $0x56c] sm:$0xff]
    %v701 = vld [vmem:[#allocation7 + $0x574] sm:$0xf]
    %v702 = vld [vmem:[#allocation7 + $0x578] sm:$0xff]
    %v703 = vld [vmem:[#allocation7 + $0x580] sm:$0xff]
    %v704 = vld [vmem:[#allocation7 + $0x588] sm:$0xf]
    %v705 = vld [vmem:[#allocation7 + $0x58c] sm:$0xff]
    %v706 = vld [vmem:[#allocation7 + $0x594] sm:$0xff]
    %v707 = vld [vmem:[#allocation7 + $0x59c] sm:$0xf]
    %v708 = vld [vmem:[#allocation7 + $0x5a0] sm:$0xff]
    %v709 = vld [vmem:[#allocation7 + $0x5a8] sm:$0xff]
    %v710 = vld [vmem:[#allocation7 + $0x5b0] sm:$0xf]
    %v711 = vld [vmem:[#allocation7 + $0x5b4] sm:$0xff]
    %v712 = vld [vmem:[#allocation7 + $0x5bc] sm:$0xff]
    %v713 = vld [vmem:[#allocation7 + $0x5c4] sm:$0xf]
    %v714 = vld [vmem:[#allocation7 + $0x5c8] sm:$0xff]
    %v715 = vld [vmem:[#allocation7 + $0x5d0] sm:$0xff]
    %v716 = vld [vmem:[#allocation7 + $0x5d8] sm:$0xf]
    %v717 = vld [vmem:[#allocation7 + $0x5dc] sm:$0xff]
    %v718 = vld [vmem:[#allocation7 + $0x5e4] sm:$0xff]
    %v719 = vld [vmem:[#allocation7 + $0x5ec] sm:$0xf]
    %v720 = vld [vmem:[#allocation7 + $0x5f0] sm:$0xff]
    %v721 = vld [vmem:[#allocation7 + $0x5f8] sm:$0xff]
    %v722 = vld [vmem:[#allocation7 + $0x600] sm:$0xf]
    %v723 = vld [vmem:[#allocation7 + $0x604] sm:$0xff]
    %v724 = vld [vmem:[#allocation7 + $0x60c] sm:$0xff]
    %v725 = vld [vmem:[#allocation7 + $0x614] sm:$0xf]
    %v726 = vld [vmem:[#allocation7 + $0x618] sm:$0xff]
    %v727 = vld [vmem:[#allocation7 + $0x620] sm:$0xff]
    %v728 = vld [vmem:[#allocation7 + $0x628] sm:$0xf]
    %v729 = vld [vmem:[#allocation7 + $0x62c] sm:$0xff]
    %v730 = vld [vmem:[#allocation7 + $0x634] sm:$0xff]
    %v731 = vld [vmem:[#allocation7 + $0x63c] sm:$0xf]
    %v732 = vld [vmem:[#allocation7 + $0x640] sm:$0xff]
    %v733 = vld [vmem:[#allocation7 + $0x648] sm:$0xff]
    %v734 = vld [vmem:[#allocation7 + $0x650] sm:$0xf]
    %v735 = vld [vmem:[#allocation7 + $0x654] sm:$0xff]
    %v736 = vld [vmem:[#allocation7 + $0x65c] sm:$0xff]
    %v737 = vld [vmem:[#allocation7 + $0x664] sm:$0xf]
    %v738 = vld [vmem:[#allocation7 + $0x668] sm:$0xff]
    %v739 = vld [vmem:[#allocation7 + $0x670] sm:$0xff]
    %v740 = vld [vmem:[#allocation7 + $0x678] sm:$0xf]
    %v741 = vld [vmem:[#allocation7 + $0x67c] sm:$0xff]
    %v742 = vld [vmem:[#allocation7 + $0x684] sm:$0xff]
    %v743 = vld [vmem:[#allocation7 + $0x68c] sm:$0xf]
    %v744 = vld [vmem:[#allocation7 + $0x690] sm:$0xff]
    %v745 = vld [vmem:[#allocation7 + $0x698] sm:$0xff]
    %v746 = vld [vmem:[#allocation7 + $0x6a0] sm:$0xf]
    %v747 = vld [vmem:[#allocation7 + $0x6a4] sm:$0xff]
    %v748 = vld [vmem:[#allocation7 + $0x6ac] sm:$0xff]
    %v749 = vld [vmem:[#allocation7 + $0x6b4] sm:$0xf]
    %v750 = vld [vmem:[#allocation7 + $0x6b8] sm:$0xff]
    %v751 = vld [vmem:[#allocation7 + $0x6c0] sm:$0xff]
    %v752 = vld [vmem:[#allocation7 + $0x6c8] sm:$0xf]
    %v753 = vld [vmem:[#allocation7 + $0x6cc] sm:$0xff]
    %v754 = vld [vmem:[#allocation7 + $0x6d4] sm:$0xff]
    %v755 = vld [vmem:[#allocation7 + $0x6dc] sm:$0xf]
    %v756 = vld [vmem:[#allocation7 + $0x6e0] sm:$0xff]
    %v757 = vld [vmem:[#allocation7 + $0x6e8] sm:$0xff]
    %v758 = vld [vmem:[#allocation7 + $0x6f0] sm:$0xf]
    %v759 = vld [vmem:[#allocation7 + $0x6f4] sm:$0xff]
    %v760 = vld [vmem:[#allocation7 + $0x6fc] sm:$0xff]
    %v761 = vld [vmem:[#allocation7 + $0x704] sm:$0xf]
    %v762 = vld [vmem:[#allocation7 + $0x708] sm:$0xff]
    %v763 = vld [vmem:[#allocation7 + $0x710] sm:$0xff]
    %v764 = vld [vmem:[#allocation7 + $0x718] sm:$0xf]
    %v765 = vld [vmem:[#allocation7 + $0x71c] sm:$0xff]
    %v766 = vld [vmem:[#allocation7 + $0x724] sm:$0xff]
    %v767 = vld [vmem:[#allocation7 + $0x72c] sm:$0xf]
    %v768 = vld [vmem:[#allocation7 + $0x730] sm:$0xff]
    %v769 = vld [vmem:[#allocation7 + $0x738] sm:$0xff]
    %v770 = vld [vmem:[#allocation7 + $0x740] sm:$0xf]
    %v771 = vld [vmem:[#allocation7 + $0x744] sm:$0xff]
    %v772 = vld [vmem:[#allocation7 + $0x74c] sm:$0xff]
    %v773 = vld [vmem:[#allocation7 + $0x754] sm:$0xf]
    %v774 = vld [vmem:[#allocation7 + $0x758] sm:$0xff]
    %v775 = vld [vmem:[#allocation7 + $0x760] sm:$0xff]
    %v776 = vld [vmem:[#allocation7 + $0x768] sm:$0xf]
    %v777 = vld [vmem:[#allocation7 + $0x76c] sm:$0xff]
    %v778 = vld [vmem:[#allocation7 + $0x774] sm:$0xff]
    %v779 = vld [vmem:[#allocation7 + $0x77c] sm:$0xf]
    %v780 = vld [vmem:[#allocation7 + $0x780] sm:$0xff]
    %v781 = vld [vmem:[#allocation7 + $0x788] sm:$0xff]
    %v782 = vld [vmem:[#allocation7 + $0x790] sm:$0xf]
    %v783 = vld [vmem:[#allocation7 + $0x794] sm:$0xff]
    %v784 = vld [vmem:[#allocation7 + $0x79c] sm:$0xff]
    %v785 = vld [vmem:[#allocation7 + $0x7a4] sm:$0xf]
    %v786 = vld [vmem:[#allocation7 + $0x7a8] sm:$0xff]
    %v787 = vld [vmem:[#allocation7 + $0x7b0] sm:$0xff]
    %v788 = vld [vmem:[#allocation7 + $0x7b8] sm:$0xf]
    %v789 = vld [vmem:[#allocation7 + $0x7bc] sm:$0xff]
    %v790 = vld [vmem:[#allocation7 + $0x7c4] sm:$0xff]
    %v791 = vld [vmem:[#allocation7 + $0x7cc] sm:$0xf]
    %v792 = vld [vmem:[%s4] sm:$0x1f]
    %v794 = vlaneseq
    %v795 = vshrl.u32 %v794, 7
    %v796 = vsub.s32 0, %v795
    %v797 = vrot.slane %v792, %v796
    %v798 = vlaneseq
    %v799 = vshrl.u32 %v798, 7
    %v800 = vsub.s32 1, %v799
    %v801 = vrot.slane %v792, %v800
    %v802 = vlaneseq
    %v803 = vshrl.u32 %v802, 7
    %v804 = vsub.s32 2, %v803
    %v805 = vrot.slane %v792, %v804
    %v806 = vlaneseq
    %v807 = vshrl.u32 %v806, 7
    %v808 = vsub.s32 3, %v807
    %v809 = vrot.slane %v792, %v808
    %v810 = vlaneseq
    %v811 = vshrl.u32 %v810, 7
    %v812 = vsub.s32 4, %v811
    %v813 = vrot.slane %v792, %v812
    %v1119 = vunpack.c.l.b16 %v492
    %v1120 = vunpack.c.h.b16 %v492
    %v1121 = vunpack.c.l.b16 %v493
    %v1122 = vunpack.c.h.b16 %v493
    %v1123 = vunpack.c.l.b16 %v494
    %v1124 = vunpack.c.l.b16 %v495
    %v1125 = vunpack.c.h.b16 %v495
    %v1126 = vunpack.c.l.b16 %v496
    %v1127 = vunpack.c.h.b16 %v496
    %v1128 = vunpack.c.l.b16 %v497
    %v1129 = vunpack.c.l.b16 %v498
    %v1130 = vunpack.c.h.b16 %v498
    %v1131 = vunpack.c.l.b16 %v499
    %v1132 = vunpack.c.h.b16 %v499
    %v1133 = vunpack.c.l.b16 %v500
    %v1134 = vunpack.c.l.b16 %v501
    %v1135 = vunpack.c.h.b16 %v501
    %v1136 = vunpack.c.l.b16 %v502
    %v1137 = vunpack.c.h.b16 %v502
    %v1138 = vunpack.c.l.b16 %v503
    %v1139 = vunpack.c.l.b16 %v504
    %v1140 = vunpack.c.h.b16 %v504
    %v1141 = vunpack.c.l.b16 %v505
    %v1142 = vunpack.c.h.b16 %v505
    %v1143 = vunpack.c.l.b16 %v506
    %v1144 = vunpack.c.l.b16 %v507
    %v1145 = vunpack.c.h.b16 %v507
    %v1146 = vunpack.c.l.b16 %v508
    %v1147 = vunpack.c.h.b16 %v508
    %v1148 = vunpack.c.l.b16 %v509
    %v1149 = vunpack.c.l.b16 %v510
    %v1150 = vunpack.c.h.b16 %v510
    %v1151 = vunpack.c.l.b16 %v511
    %v1152 = vunpack.c.h.b16 %v511
    %v1153 = vunpack.c.l.b16 %v512
    %v1154 = vunpack.c.l.b16 %v513
    %v1155 = vunpack.c.h.b16 %v513
    %v1156 = vunpack.c.l.b16 %v514
    %v1157 = vunpack.c.h.b16 %v514
    %v1158 = vunpack.c.l.b16 %v515
    %v1159 = vunpack.c.l.b16 %v516
    %v1160 = vunpack.c.h.b16 %v516
    %v1161 = vunpack.c.l.b16 %v517
    %v1162 = vunpack.c.h.b16 %v517
    %v1163 = vunpack.c.l.b16 %v518
    %v1164 = vunpack.c.l.b16 %v519
    %v1165 = vunpack.c.h.b16 %v519
    %v1166 = vunpack.c.l.b16 %v520
    %v1167 = vunpack.c.h.b16 %v520
    %v1168 = vunpack.c.l.b16 %v521
    %v1169 = vunpack.c.l.b16 %v522
    %v1170 = vunpack.c.h.b16 %v522
    %v1171 = vunpack.c.l.b16 %v523
    %v1172 = vunpack.c.h.b16 %v523
    %v1173 = vunpack.c.l.b16 %v524
    %v1174 = vunpack.c.l.b16 %v525
    %v1175 = vunpack.c.h.b16 %v525
    %v1176 = vunpack.c.l.b16 %v526
    %v1177 = vunpack.c.h.b16 %v526
    %v1178 = vunpack.c.l.b16 %v527
    %v1179 = vunpack.c.l.b16 %v528
    %v1180 = vunpack.c.h.b16 %v528
    %v1181 = vunpack.c.l.b16 %v529
    %v1182 = vunpack.c.h.b16 %v529
    %v1183 = vunpack.c.l.b16 %v530
    %v1184 = vunpack.c.l.b16 %v531
    %v1185 = vunpack.c.h.b16 %v531
    %v1186 = vunpack.c.l.b16 %v532
    %v1187 = vunpack.c.h.b16 %v532
    %v1188 = vunpack.c.l.b16 %v533
    %v1189 = vunpack.c.l.b16 %v534
    %v1190 = vunpack.c.h.b16 %v534
    %v1191 = vunpack.c.l.b16 %v535
    %v1192 = vunpack.c.h.b16 %v535
    %v1193 = vunpack.c.l.b16 %v536
    %v1194 = vunpack.c.l.b16 %v537
    %v1195 = vunpack.c.h.b16 %v537
    %v1196 = vunpack.c.l.b16 %v538
    %v1197 = vunpack.c.h.b16 %v538
    %v1198 = vunpack.c.l.b16 %v539
    %v1199 = vunpack.c.l.b16 %v540
    %v1200 = vunpack.c.h.b16 %v540
    %v1201 = vunpack.c.l.b16 %v541
    %v1202 = vunpack.c.h.b16 %v541
    %v1203 = vunpack.c.l.b16 %v542
    %v1204 = vunpack.c.l.b16 %v543
    %v1205 = vunpack.c.h.b16 %v543
    %v1206 = vunpack.c.l.b16 %v544
    %v1207 = vunpack.c.h.b16 %v544
    %v1208 = vunpack.c.l.b16 %v545
    %v1209 = vunpack.c.l.b16 %v546
    %v1210 = vunpack.c.h.b16 %v546
    %v1211 = vunpack.c.l.b16 %v547
    %v1212 = vunpack.c.h.b16 %v547
    %v1213 = vunpack.c.l.b16 %v548
    %v1214 = vunpack.c.l.b16 %v549
    %v1215 = vunpack.c.h.b16 %v549
    %v1216 = vunpack.c.l.b16 %v550
    %v1217 = vunpack.c.h.b16 %v550
    %v1218 = vunpack.c.l.b16 %v551
    %v1219 = vunpack.c.l.b16 %v552
    %v1220 = vunpack.c.h.b16 %v552
    %v1221 = vunpack.c.l.b16 %v553
    %v1222 = vunpack.c.h.b16 %v553
    %v1223 = vunpack.c.l.b16 %v554
    %v1224 = vunpack.c.l.b16 %v555
    %v1225 = vunpack.c.h.b16 %v555
    %v1226 = vunpack.c.l.b16 %v556
    %v1227 = vunpack.c.h.b16 %v556
    %v1228 = vunpack.c.l.b16 %v557
    %v1229 = vunpack.c.l.b16 %v558
    %v1230 = vunpack.c.h.b16 %v558
    %v1231 = vunpack.c.l.b16 %v559
    %v1232 = vunpack.c.h.b16 %v559
    %v1233 = vunpack.c.l.b16 %v560
    %v1234 = vunpack.c.l.b16 %v561
    %v1235 = vunpack.c.h.b16 %v561
    %v1236 = vunpack.c.l.b16 %v562
    %v1237 = vunpack.c.h.b16 %v562
    %v1238 = vunpack.c.l.b16 %v563
    %v1239 = vunpack.c.l.b16 %v564
    %v1240 = vunpack.c.h.b16 %v564
    %v1241 = vunpack.c.l.b16 %v565
    %v1242 = vunpack.c.h.b16 %v565
    %v1243 = vunpack.c.l.b16 %v566
    %v1244 = vunpack.c.l.b16 %v567
    %v1245 = vunpack.c.h.b16 %v567
    %v1246 = vunpack.c.l.b16 %v568
    %v1247 = vunpack.c.h.b16 %v568
    %v1248 = vunpack.c.l.b16 %v569
    %v1249 = vunpack.c.l.b16 %v570
    %v1250 = vunpack.c.h.b16 %v570
    %v1251 = vunpack.c.l.b16 %v571
    %v1252 = vunpack.c.h.b16 %v571
    %v1253 = vunpack.c.l.b16 %v572
    %v1254 = vunpack.c.l.b16 %v573
    %v1255 = vunpack.c.h.b16 %v573
    %v1256 = vunpack.c.l.b16 %v574
    %v1257 = vunpack.c.h.b16 %v574
    %v1258 = vunpack.c.l.b16 %v575
    %v1259 = vunpack.c.l.b16 %v576
    %v1260 = vunpack.c.h.b16 %v576
    %v1261 = vunpack.c.l.b16 %v577
    %v1262 = vunpack.c.h.b16 %v577
    %v1263 = vunpack.c.l.b16 %v578
    %v1264 = vunpack.c.l.b16 %v579
    %v1265 = vunpack.c.h.b16 %v579
    %v1266 = vunpack.c.l.b16 %v580
    %v1267 = vunpack.c.h.b16 %v580
    %v1268 = vunpack.c.l.b16 %v581
    %v1269 = vunpack.c.l.b16 %v582
    %v1270 = vunpack.c.h.b16 %v582
    %v1271 = vunpack.c.l.b16 %v583
    %v1272 = vunpack.c.h.b16 %v583
    %v1273 = vunpack.c.l.b16 %v584
    %v1274 = vunpack.c.l.b16 %v585
    %v1275 = vunpack.c.h.b16 %v585
    %v1276 = vunpack.c.l.b16 %v586
    %v1277 = vunpack.c.h.b16 %v586
    %v1278 = vunpack.c.l.b16 %v587
    %v1279 = vunpack.c.l.b16 %v588
    %v1280 = vunpack.c.h.b16 %v588
    %v1281 = vunpack.c.l.b16 %v589
    %v1282 = vunpack.c.h.b16 %v589
    %v1283 = vunpack.c.l.b16 %v590
    %v1284 = vunpack.c.l.b16 %v591
    %v1285 = vunpack.c.h.b16 %v591
    %v1286 = vunpack.c.l.b16 %v592
    %v1287 = vunpack.c.h.b16 %v592
    %v1288 = vunpack.c.l.b16 %v593
    %v1289 = vunpack.c.l.b16 %v594
    %v1290 = vunpack.c.h.b16 %v594
    %v1291 = vunpack.c.l.b16 %v595
    %v1292 = vunpack.c.h.b16 %v595
    %v1293 = vunpack.c.l.b16 %v596
    %v1294 = vunpack.c.l.b16 %v597
    %v1295 = vunpack.c.h.b16 %v597
    %v1296 = vunpack.c.l.b16 %v598
    %v1297 = vunpack.c.h.b16 %v598
    %v1298 = vunpack.c.l.b16 %v599
    %v1299 = vunpack.c.l.b16 %v600
    %v1300 = vunpack.c.h.b16 %v600
    %v1301 = vunpack.c.l.b16 %v601
    %v1302 = vunpack.c.h.b16 %v601
    %v1303 = vunpack.c.l.b16 %v602
    %v1304 = vunpack.c.l.b16 %v603
    %v1305 = vunpack.c.h.b16 %v603
    %v1306 = vunpack.c.l.b16 %v604
    %v1307 = vunpack.c.h.b16 %v604
    %v1308 = vunpack.c.l.b16 %v605
    %v1309 = vunpack.c.l.b16 %v606
    %v1310 = vunpack.c.h.b16 %v606
    %v1311 = vunpack.c.l.b16 %v607
    %v1312 = vunpack.c.h.b16 %v607
    %v1313 = vunpack.c.l.b16 %v608
    %v1314 = vunpack.c.l.b16 %v609
    %v1315 = vunpack.c.h.b16 %v609
    %v1316 = vunpack.c.l.b16 %v610
    %v1317 = vunpack.c.h.b16 %v610
    %v1318 = vunpack.c.l.b16 %v611
    %v1319 = vunpack.c.l.b16 %v612
    %v1320 = vunpack.c.h.b16 %v612
    %v1321 = vunpack.c.l.b16 %v613
    %v1322 = vunpack.c.h.b16 %v613
    %v1323 = vunpack.c.l.b16 %v614
    %v1324 = vunpack.c.l.b16 %v615
    %v1325 = vunpack.c.h.b16 %v615
    %v1326 = vunpack.c.l.b16 %v616
    %v1327 = vunpack.c.h.b16 %v616
    %v1328 = vunpack.c.l.b16 %v617
    %v1329 = vunpack.c.l.b16 %v618
    %v1330 = vunpack.c.h.b16 %v618
    %v1331 = vunpack.c.l.b16 %v619
    %v1332 = vunpack.c.h.b16 %v619
    %v1333 = vunpack.c.l.b16 %v620
    %v1334 = vunpack.c.l.b16 %v621
    %v1335 = vunpack.c.h.b16 %v621
    %v1336 = vunpack.c.l.b16 %v622
    %v1337 = vunpack.c.h.b16 %v622
    %v1338 = vunpack.c.l.b16 %v623
    %v1339 = vunpack.c.l.b16 %v624
    %v1340 = vunpack.c.h.b16 %v624
    %v1341 = vunpack.c.l.b16 %v625
    %v1342 = vunpack.c.h.b16 %v625
    %v1343 = vunpack.c.l.b16 %v626
    %v1344 = vunpack.c.l.b16 %v627
    %v1345 = vunpack.c.h.b16 %v627
    %v1346 = vunpack.c.l.b16 %v628
    %v1347 = vunpack.c.h.b16 %v628
    %v1348 = vunpack.c.l.b16 %v629
    %v1349 = vunpack.c.l.b16 %v630
    %v1350 = vunpack.c.h.b16 %v630
    %v1351 = vunpack.c.l.b16 %v631
    %v1352 = vunpack.c.h.b16 %v631
    %v1353 = vunpack.c.l.b16 %v632
    %v1354 = vunpack.c.l.b16 %v633
    %v1355 = vunpack.c.h.b16 %v633
    %v1356 = vunpack.c.l.b16 %v634
    %v1357 = vunpack.c.h.b16 %v634
    %v1358 = vunpack.c.l.b16 %v635
    %v1359 = vunpack.c.l.b16 %v636
    %v1360 = vunpack.c.h.b16 %v636
    %v1361 = vunpack.c.l.b16 %v637
    %v1362 = vunpack.c.h.b16 %v637
    %v1363 = vunpack.c.l.b16 %v638
    %v1364 = vunpack.c.l.b16 %v639
    %v1365 = vunpack.c.h.b16 %v639
    %v1366 = vunpack.c.l.b16 %v640
    %v1367 = vunpack.c.h.b16 %v640
    %v1368 = vunpack.c.l.b16 %v641
    %v1369 = vunpack.c.l.b16 %v642
    %v1370 = vunpack.c.h.b16 %v642
    %v1371 = vunpack.c.l.b16 %v643
    %v1372 = vunpack.c.h.b16 %v643
    %v1373 = vunpack.c.l.b16 %v644
    %v1374 = vunpack.c.l.b16 %v645
    %v1375 = vunpack.c.h.b16 %v645
    %v1376 = vunpack.c.l.b16 %v646
    %v1377 = vunpack.c.h.b16 %v646
    %v1378 = vunpack.c.l.b16 %v647
    %v1379 = vunpack.c.l.b16 %v648
    %v1380 = vunpack.c.h.b16 %v648
    %v1381 = vunpack.c.l.b16 %v649
    %v1382 = vunpack.c.h.b16 %v649
    %v1383 = vunpack.c.l.b16 %v650
    %v1384 = vunpack.c.l.b16 %v651
    %v1385 = vunpack.c.h.b16 %v651
    %v1386 = vunpack.c.l.b16 %v652
    %v1387 = vunpack.c.h.b16 %v652
    %v1388 = vunpack.c.l.b16 %v653
    %v1389 = vunpack.c.l.b16 %v654
    %v1390 = vunpack.c.h.b16 %v654
    %v1391 = vunpack.c.l.b16 %v655
    %v1392 = vunpack.c.h.b16 %v655
    %v1393 = vunpack.c.l.b16 %v656
    %v1394 = vunpack.c.l.b16 %v657
    %v1395 = vunpack.c.h.b16 %v657
    %v1396 = vunpack.c.l.b16 %v658
    %v1397 = vunpack.c.h.b16 %v658
    %v1398 = vunpack.c.l.b16 %v659
    %v1399 = vunpack.c.l.b16 %v660
    %v1400 = vunpack.c.h.b16 %v660
    %v1401 = vunpack.c.l.b16 %v661
    %v1402 = vunpack.c.h.b16 %v661
    %v1403 = vunpack.c.l.b16 %v662
    %v1404 = vunpack.c.l.b16 %v663
    %v1405 = vunpack.c.h.b16 %v663
    %v1406 = vunpack.c.l.b16 %v664
    %v1407 = vunpack.c.h.b16 %v664
    %v1408 = vunpack.c.l.b16 %v665
    %v1409 = vunpack.c.l.b16 %v666
    %v1410 = vunpack.c.h.b16 %v666
    %v1411 = vunpack.c.l.b16 %v667
    %v1412 = vunpack.c.h.b16 %v667
    %v1413 = vunpack.c.l.b16 %v668
    %v1414 = vunpack.c.l.b16 %v669
    %v1415 = vunpack.c.h.b16 %v669
    %v1416 = vunpack.c.l.b16 %v670
    %v1417 = vunpack.c.h.b16 %v670
    %v1418 = vunpack.c.l.b16 %v671
    %v1419 = vunpack.c.l.b16 %v672
    %v1420 = vunpack.c.h.b16 %v672
    %v1421 = vunpack.c.l.b16 %v673
    %v1422 = vunpack.c.h.b16 %v673
    %v1423 = vunpack.c.l.b16 %v674
    %v1424 = vunpack.c.l.b16 %v675
    %v1425 = vunpack.c.h.b16 %v675
    %v1426 = vunpack.c.l.b16 %v676
    %v1427 = vunpack.c.h.b16 %v676
    %v1428 = vunpack.c.l.b16 %v677
    %v1429 = vunpack.c.l.b16 %v678
    %v1430 = vunpack.c.h.b16 %v678
    %v1431 = vunpack.c.l.b16 %v679
    %v1432 = vunpack.c.h.b16 %v679
    %v1433 = vunpack.c.l.b16 %v680
    %v1434 = vunpack.c.l.b16 %v681
    %v1435 = vunpack.c.h.b16 %v681
    %v1436 = vunpack.c.l.b16 %v682
    %v1437 = vunpack.c.h.b16 %v682
    %v1438 = vunpack.c.l.b16 %v683
    %v1439 = vunpack.c.l.b16 %v684
    %v1440 = vunpack.c.h.b16 %v684
    %v1441 = vunpack.c.l.b16 %v685
    %v1442 = vunpack.c.h.b16 %v685
    %v1443 = vunpack.c.l.b16 %v686
    %v1444 = vunpack.c.l.b16 %v687
    %v1445 = vunpack.c.h.b16 %v687
    %v1446 = vunpack.c.l.b16 %v688
    %v1447 = vunpack.c.h.b16 %v688
    %v1448 = vunpack.c.l.b16 %v689
    %v1449 = vunpack.c.l.b16 %v690
    %v1450 = vunpack.c.h.b16 %v690
    %v1451 = vunpack.c.l.b16 %v691
    %v1452 = vunpack.c.h.b16 %v691
    %v1453 = vunpack.c.l.b16 %v692
    %v1454 = vunpack.c.l.b16 %v693
    %v1455 = vunpack.c.h.b16 %v693
    %v1456 = vunpack.c.l.b16 %v694
    %v1457 = vunpack.c.h.b16 %v694
    %v1458 = vunpack.c.l.b16 %v695
    %v1459 = vunpack.c.l.b16 %v696
    %v1460 = vunpack.c.h.b16 %v696
    %v1461 = vunpack.c.l.b16 %v697
    %v1462 = vunpack.c.h.b16 %v697
    %v1463 = vunpack.c.l.b16 %v698
    %v1464 = vunpack.c.l.b16 %v699
    %v1465 = vunpack.c.h.b16 %v699
    %v1466 = vunpack.c.l.b16 %v700
    %v1467 = vunpack.c.h.b16 %v700
    %v1468 = vunpack.c.l.b16 %v701
    %v1469 = vunpack.c.l.b16 %v702
    %v1470 = vunpack.c.h.b16 %v702
    %v1471 = vunpack.c.l.b16 %v703
    %v1472 = vunpack.c.h.b16 %v703
    %v1473 = vunpack.c.l.b16 %v704
    %v1474 = vunpack.c.l.b16 %v705
    %v1475 = vunpack.c.h.b16 %v705
    %v1476 = vunpack.c.l.b16 %v706
    %v1477 = vunpack.c.h.b16 %v706
    %v1478 = vunpack.c.l.b16 %v707
    %v1479 = vunpack.c.l.b16 %v708
    %v1480 = vunpack.c.h.b16 %v708
    %v1481 = vunpack.c.l.b16 %v709
    %v1482 = vunpack.c.h.b16 %v709
    %v1483 = vunpack.c.l.b16 %v710
    %v1484 = vunpack.c.l.b16 %v711
    %v1485 = vunpack.c.h.b16 %v711
    %v1486 = vunpack.c.l.b16 %v712
    %v1487 = vunpack.c.h.b16 %v712
    %v1488 = vunpack.c.l.b16 %v713
    %v1489 = vunpack.c.l.b16 %v714
    %v1490 = vunpack.c.h.b16 %v714
    %v1491 = vunpack.c.l.b16 %v715
    %v1492 = vunpack.c.h.b16 %v715
    %v1493 = vunpack.c.l.b16 %v716
    %v1494 = vunpack.c.l.b16 %v717
    %v1495 = vunpack.c.h.b16 %v717
    %v1496 = vunpack.c.l.b16 %v718
    %v1497 = vunpack.c.h.b16 %v718
    %v1498 = vunpack.c.l.b16 %v719
    %v1499 = vunpack.c.l.b16 %v720
    %v1500 = vunpack.c.h.b16 %v720
    %v1501 = vunpack.c.l.b16 %v721
    %v1502 = vunpack.c.h.b16 %v721
    %v1503 = vunpack.c.l.b16 %v722
    %v1504 = vunpack.c.l.b16 %v723
    %v1505 = vunpack.c.h.b16 %v723
    %v1506 = vunpack.c.l.b16 %v724
    %v1507 = vunpack.c.h.b16 %v724
    %v1508 = vunpack.c.l.b16 %v725
    %v1509 = vunpack.c.l.b16 %v726
    %v1510 = vunpack.c.h.b16 %v726
    %v1511 = vunpack.c.l.b16 %v727
    %v1512 = vunpack.c.h.b16 %v727
    %v1513 = vunpack.c.l.b16 %v728
    %v1514 = vunpack.c.l.b16 %v729
    %v1515 = vunpack.c.h.b16 %v729
    %v1516 = vunpack.c.l.b16 %v730
    %v1517 = vunpack.c.h.b16 %v730
    %v1518 = vunpack.c.l.b16 %v731
    %v1519 = vunpack.c.l.b16 %v732
    %v1520 = vunpack.c.h.b16 %v732
    %v1521 = vunpack.c.l.b16 %v733
    %v1522 = vunpack.c.h.b16 %v733
    %v1523 = vunpack.c.l.b16 %v734
    %v1524 = vunpack.c.l.b16 %v735
    %v1525 = vunpack.c.h.b16 %v735
    %v1526 = vunpack.c.l.b16 %v736
    %v1527 = vunpack.c.h.b16 %v736
    %v1528 = vunpack.c.l.b16 %v737
    %v1529 = vunpack.c.l.b16 %v738
    %v1530 = vunpack.c.h.b16 %v738
    %v1531 = vunpack.c.l.b16 %v739
    %v1532 = vunpack.c.h.b16 %v739
    %v1533 = vunpack.c.l.b16 %v740
    %v1534 = vunpack.c.l.b16 %v741
    %v1535 = vunpack.c.h.b16 %v741
    %v1536 = vunpack.c.l.b16 %v742
    %v1537 = vunpack.c.h.b16 %v742
    %v1538 = vunpack.c.l.b16 %v743
    %v1539 = vunpack.c.l.b16 %v744
    %v1540 = vunpack.c.h.b16 %v744
    %v1541 = vunpack.c.l.b16 %v745
    %v1542 = vunpack.c.h.b16 %v745
    %v1543 = vunpack.c.l.b16 %v746
    %v1544 = vunpack.c.l.b16 %v747
    %v1545 = vunpack.c.h.b16 %v747
    %v1546 = vunpack.c.l.b16 %v748
    %v1547 = vunpack.c.h.b16 %v748
    %v1548 = vunpack.c.l.b16 %v749
    %v1549 = vunpack.c.l.b16 %v750
    %v1550 = vunpack.c.h.b16 %v750
    %v1551 = vunpack.c.l.b16 %v751
    %v1552 = vunpack.c.h.b16 %v751
    %v1553 = vunpack.c.l.b16 %v752
    %v1554 = vunpack.c.l.b16 %v753
    %v1555 = vunpack.c.h.b16 %v753
    %v1556 = vunpack.c.l.b16 %v754
    %v1557 = vunpack.c.h.b16 %v754
    %v1558 = vunpack.c.l.b16 %v755
    %v1559 = vunpack.c.l.b16 %v756
    %v1560 = vunpack.c.h.b16 %v756
    %v1561 = vunpack.c.l.b16 %v757
    %v1562 = vunpack.c.h.b16 %v757
    %v1563 = vunpack.c.l.b16 %v758
    %v1564 = vunpack.c.l.b16 %v759
    %v1565 = vunpack.c.h.b16 %v759
    %v1566 = vunpack.c.l.b16 %v760
    %v1567 = vunpack.c.h.b16 %v760
    %v1568 = vunpack.c.l.b16 %v761
    %v1569 = vunpack.c.l.b16 %v762
    %v1570 = vunpack.c.h.b16 %v762
    %v1571 = vunpack.c.l.b16 %v763
    %v1572 = vunpack.c.h.b16 %v763
    %v1573 = vunpack.c.l.b16 %v764
    %v1574 = vunpack.c.l.b16 %v765
    %v1575 = vunpack.c.h.b16 %v765
    %v1576 = vunpack.c.l.b16 %v766
    %v1577 = vunpack.c.h.b16 %v766
    %v1578 = vunpack.c.l.b16 %v767
    %v1579 = vunpack.c.l.b16 %v768
    %v1580 = vunpack.c.h.b16 %v768
    %v1581 = vunpack.c.l.b16 %v769
    %v1582 = vunpack.c.h.b16 %v769
    %v1583 = vunpack.c.l.b16 %v770
    %v1584 = vunpack.c.l.b16 %v771
    %v1585 = vunpack.c.h.b16 %v771
    %v1586 = vunpack.c.l.b16 %v772
    %v1587 = vunpack.c.h.b16 %v772
    %v1588 = vunpack.c.l.b16 %v773
    %v1589 = vunpack.c.l.b16 %v774
    %v1590 = vunpack.c.h.b16 %v774
    %v1591 = vunpack.c.l.b16 %v775
    %v1592 = vunpack.c.h.b16 %v775
    %v1593 = vunpack.c.l.b16 %v776
    %v1594 = vunpack.c.l.b16 %v777
    %v1595 = vunpack.c.h.b16 %v777
    %v1596 = vunpack.c.l.b16 %v778
    %v1597 = vunpack.c.h.b16 %v778
    %v1598 = vunpack.c.l.b16 %v779
    %v1599 = vunpack.c.l.b16 %v780
    %v1600 = vunpack.c.h.b16 %v780
    %v1601 = vunpack.c.l.b16 %v781
    %v1602 = vunpack.c.h.b16 %v781
    %v1603 = vunpack.c.l.b16 %v782
    %v1604 = vunpack.c.l.b16 %v783
    %v1605 = vunpack.c.h.b16 %v783
    %v1606 = vunpack.c.l.b16 %v784
    %v1607 = vunpack.c.h.b16 %v784
    %v1608 = vunpack.c.l.b16 %v785
    %v1609 = vunpack.c.l.b16 %v786
    %v1610 = vunpack.c.h.b16 %v786
    %v1611 = vunpack.c.l.b16 %v787
    %v1612 = vunpack.c.h.b16 %v787
    %v1613 = vunpack.c.l.b16 %v788
    %v1614 = vunpack.c.l.b16 %v789
    %v1615 = vunpack.c.h.b16 %v789
    %v1616 = vunpack.c.l.b16 %v790
    %v1617 = vunpack.c.h.b16 %v790
    %v1618 = vunpack.c.l.b16 %v791
    %v1619 = vpack.c.b16 %v1124, %v1119
    %v1620 = vpack.c.b16 %v1125, %v1120
    %v1621 = vpack.c.b16 %v1126, %v1121
    %v1622 = vpack.c.b16 %v1127, %v1122
    %v1623 = vpack.c.b16 %v1128, %v1123
    %v1624 = vpack.c.b16 %v1134, %v1129
    %v1625 = vpack.c.b16 %v1135, %v1130
    %v1626 = vpack.c.b16 %v1136, %v1131
    %v1627 = vpack.c.b16 %v1137, %v1132
    %v1628 = vpack.c.b16 %v1138, %v1133
    %v1629 = vpack.c.b16 %v1144, %v1139
    %v1630 = vpack.c.b16 %v1145, %v1140
    %v1631 = vpack.c.b16 %v1146, %v1141
    %v1632 = vpack.c.b16 %v1147, %v1142
    %v1633 = vpack.c.b16 %v1148, %v1143
    %v1634 = vpack.c.b16 %v1154, %v1149
    %v1635 = vpack.c.b16 %v1155, %v1150
    %v1636 = vpack.c.b16 %v1156, %v1151
    %v1637 = vpack.c.b16 %v1157, %v1152
    %v1638 = vpack.c.b16 %v1158, %v1153
    %v1639 = vpack.c.b16 %v1164, %v1159
    %v1640 = vpack.c.b16 %v1165, %v1160
    %v1641 = vpack.c.b16 %v1166, %v1161
    %v1642 = vpack.c.b16 %v1167, %v1162
    %v1643 = vpack.c.b16 %v1168, %v1163
    %v1644 = vpack.c.b16 %v1174, %v1169
    %v1645 = vpack.c.b16 %v1175, %v1170
    %v1646 = vpack.c.b16 %v1176, %v1171
    %v1647 = vpack.c.b16 %v1177, %v1172
    %v1648 = vpack.c.b16 %v1178, %v1173
    %v1649 = vpack.c.b16 %v1184, %v1179
    %v1650 = vpack.c.b16 %v1185, %v1180
    %v1651 = vpack.c.b16 %v1186, %v1181
    %v1652 = vpack.c.b16 %v1187, %v1182
    %v1653 = vpack.c.b16 %v1188, %v1183
    %v1654 = vpack.c.b16 %v1194, %v1189
    %v1655 = vpack.c.b16 %v1195, %v1190
    %v1656 = vpack.c.b16 %v1196, %v1191
    %v1657 = vpack.c.b16 %v1197, %v1192
    %v1658 = vpack.c.b16 %v1198, %v1193
    %v1659 = vpack.c.b16 %v1204, %v1199
    %v1660 = vpack.c.b16 %v1205, %v1200
    %v1661 = vpack.c.b16 %v1206, %v1201
    %v1662 = vpack.c.b16 %v1207, %v1202
    %v1663 = vpack.c.b16 %v1208, %v1203
    %v1664 = vpack.c.b16 %v1214, %v1209
    %v1665 = vpack.c.b16 %v1215, %v1210
    %v1666 = vpack.c.b16 %v1216, %v1211
    %v1667 = vpack.c.b16 %v1217, %v1212
    %v1668 = vpack.c.b16 %v1218, %v1213
    %v1669 = vpack.c.b16 %v1224, %v1219
    %v1670 = vpack.c.b16 %v1225, %v1220
    %v1671 = vpack.c.b16 %v1226, %v1221
    %v1672 = vpack.c.b16 %v1227, %v1222
    %v1673 = vpack.c.b16 %v1228, %v1223
    %v1674 = vpack.c.b16 %v1234, %v1229
    %v1675 = vpack.c.b16 %v1235, %v1230
    %v1676 = vpack.c.b16 %v1236, %v1231
    %v1677 = vpack.c.b16 %v1237, %v1232
    %v1678 = vpack.c.b16 %v1238, %v1233
    %v1679 = vpack.c.b16 %v1244, %v1239
    %v1680 = vpack.c.b16 %v1245, %v1240
    %v1681 = vpack.c.b16 %v1246, %v1241
    %v1682 = vpack.c.b16 %v1247, %v1242
    %v1683 = vpack.c.b16 %v1248, %v1243
    %v1684 = vpack.c.b16 %v1254, %v1249
    %v1685 = vpack.c.b16 %v1255, %v1250
    %v1686 = vpack.c.b16 %v1256, %v1251
    %v1687 = vpack.c.b16 %v1257, %v1252
    %v1688 = vpack.c.b16 %v1258, %v1253
    %v1689 = vpack.c.b16 %v1264, %v1259
    %v1690 = vpack.c.b16 %v1265, %v1260
    %v1691 = vpack.c.b16 %v1266, %v1261
    %v1692 = vpack.c.b16 %v1267, %v1262
    %v1693 = vpack.c.b16 %v1268, %v1263
    %v1694 = vpack.c.b16 %v1274, %v1269
    %v1695 = vpack.c.b16 %v1275, %v1270
    %v1696 = vpack.c.b16 %v1276, %v1271
    %v1697 = vpack.c.b16 %v1277, %v1272
    %v1698 = vpack.c.b16 %v1278, %v1273
    %v1699 = vpack.c.b16 %v1284, %v1279
    %v1700 = vpack.c.b16 %v1285, %v1280
    %v1701 = vpack.c.b16 %v1286, %v1281
    %v1702 = vpack.c.b16 %v1287, %v1282
    %v1703 = vpack.c.b16 %v1288, %v1283
    %v1704 = vpack.c.b16 %v1294, %v1289
    %v1705 = vpack.c.b16 %v1295, %v1290
    %v1706 = vpack.c.b16 %v1296, %v1291
    %v1707 = vpack.c.b16 %v1297, %v1292
    %v1708 = vpack.c.b16 %v1298, %v1293
    %v1709 = vpack.c.b16 %v1304, %v1299
    %v1710 = vpack.c.b16 %v1305, %v1300
    %v1711 = vpack.c.b16 %v1306, %v1301
    %v1712 = vpack.c.b16 %v1307, %v1302
    %v1713 = vpack.c.b16 %v1308, %v1303
    %v1714 = vpack.c.b16 %v1314, %v1309
    %v1715 = vpack.c.b16 %v1315, %v1310
    %v1716 = vpack.c.b16 %v1316, %v1311
    %v1717 = vpack.c.b16 %v1317, %v1312
    %v1718 = vpack.c.b16 %v1318, %v1313
    %v1719 = vpack.c.b16 %v1324, %v1319
    %v1720 = vpack.c.b16 %v1325, %v1320
    %v1721 = vpack.c.b16 %v1326, %v1321
    %v1722 = vpack.c.b16 %v1327, %v1322
    %v1723 = vpack.c.b16 %v1328, %v1323
    %v1724 = vpack.c.b16 %v1334, %v1329
    %v1725 = vpack.c.b16 %v1335, %v1330
    %v1726 = vpack.c.b16 %v1336, %v1331
    %v1727 = vpack.c.b16 %v1337, %v1332
    %v1728 = vpack.c.b16 %v1338, %v1333
    %v1729 = vpack.c.b16 %v1344, %v1339
    %v1730 = vpack.c.b16 %v1345, %v1340
    %v1731 = vpack.c.b16 %v1346, %v1341
    %v1732 = vpack.c.b16 %v1347, %v1342
    %v1733 = vpack.c.b16 %v1348, %v1343
    %v1734 = vpack.c.b16 %v1354, %v1349
    %v1735 = vpack.c.b16 %v1355, %v1350
    %v1736 = vpack.c.b16 %v1356, %v1351
    %v1737 = vpack.c.b16 %v1357, %v1352
    %v1738 = vpack.c.b16 %v1358, %v1353
    %v1739 = vpack.c.b16 %v1364, %v1359
    %v1740 = vpack.c.b16 %v1365, %v1360
    %v1741 = vpack.c.b16 %v1366, %v1361
    %v1742 = vpack.c.b16 %v1367, %v1362
    %v1743 = vpack.c.b16 %v1368, %v1363
    %v1744 = vpack.c.b16 %v1374, %v1369
    %v1745 = vpack.c.b16 %v1375, %v1370
    %v1746 = vpack.c.b16 %v1376, %v1371
    %v1747 = vpack.c.b16 %v1377, %v1372
    %v1748 = vpack.c.b16 %v1378, %v1373
    %v1749 = vpack.c.b16 %v1384, %v1379
    %v1750 = vpack.c.b16 %v1385, %v1380
    %v1751 = vpack.c.b16 %v1386, %v1381
    %v1752 = vpack.c.b16 %v1387, %v1382
    %v1753 = vpack.c.b16 %v1388, %v1383
    %v1754 = vpack.c.b16 %v1394, %v1389
    %v1755 = vpack.c.b16 %v1395, %v1390
    %v1756 = vpack.c.b16 %v1396, %v1391
    %v1757 = vpack.c.b16 %v1397, %v1392
    %v1758 = vpack.c.b16 %v1398, %v1393
    %v1759 = vpack.c.b16 %v1404, %v1399
    %v1760 = vpack.c.b16 %v1405, %v1400
    %v1761 = vpack.c.b16 %v1406, %v1401
    %v1762 = vpack.c.b16 %v1407, %v1402
    %v1763 = vpack.c.b16 %v1408, %v1403
    %v1764 = vpack.c.b16 %v1414, %v1409
    %v1765 = vpack.c.b16 %v1415, %v1410
    %v1766 = vpack.c.b16 %v1416, %v1411
    %v1767 = vpack.c.b16 %v1417, %v1412
    %v1768 = vpack.c.b16 %v1418, %v1413
    %v1769 = vpack.c.b16 %v1424, %v1419
    %v1770 = vpack.c.b16 %v1425, %v1420
    %v1771 = vpack.c.b16 %v1426, %v1421
    %v1772 = vpack.c.b16 %v1427, %v1422
    %v1773 = vpack.c.b16 %v1428, %v1423
    %v1774 = vpack.c.b16 %v1434, %v1429
    %v1775 = vpack.c.b16 %v1435, %v1430
    %v1776 = vpack.c.b16 %v1436, %v1431
    %v1777 = vpack.c.b16 %v1437, %v1432
    %v1778 = vpack.c.b16 %v1438, %v1433
    %v1779 = vpack.c.b16 %v1444, %v1439
    %v1780 = vpack.c.b16 %v1445, %v1440
    %v1781 = vpack.c.b16 %v1446, %v1441
    %v1782 = vpack.c.b16 %v1447, %v1442
    %v1783 = vpack.c.b16 %v1448, %v1443
    %v1784 = vpack.c.b16 %v1454, %v1449
    %v1785 = vpack.c.b16 %v1455, %v1450
    %v1786 = vpack.c.b16 %v1456, %v1451
    %v1787 = vpack.c.b16 %v1457, %v1452
    %v1788 = vpack.c.b16 %v1458, %v1453
    %v1789 = vpack.c.b16 %v1464, %v1459
    %v1790 = vpack.c.b16 %v1465, %v1460
    %v1791 = vpack.c.b16 %v1466, %v1461
    %v1792 = vpack.c.b16 %v1467, %v1462
    %v1793 = vpack.c.b16 %v1468, %v1463
    %v1794 = vpack.c.b16 %v1474, %v1469
    %v1795 = vpack.c.b16 %v1475, %v1470
    %v1796 = vpack.c.b16 %v1476, %v1471
    %v1797 = vpack.c.b16 %v1477, %v1472
    %v1798 = vpack.c.b16 %v1478, %v1473
    %v1799 = vpack.c.b16 %v1484, %v1479
    %v1800 = vpack.c.b16 %v1485, %v1480
    %v1801 = vpack.c.b16 %v1486, %v1481
    %v1802 = vpack.c.b16 %v1487, %v1482
    %v1803 = vpack.c.b16 %v1488, %v1483
    %v1804 = vpack.c.b16 %v1494, %v1489
    %v1805 = vpack.c.b16 %v1495, %v1490
    %v1806 = vpack.c.b16 %v1496, %v1491
    %v1807 = vpack.c.b16 %v1497, %v1492
    %v1808 = vpack.c.b16 %v1498, %v1493
    %v1809 = vpack.c.b16 %v1504, %v1499
    %v1810 = vpack.c.b16 %v1505, %v1500
    %v1811 = vpack.c.b16 %v1506, %v1501
    %v1812 = vpack.c.b16 %v1507, %v1502
    %v1813 = vpack.c.b16 %v1508, %v1503
    %v1814 = vpack.c.b16 %v1514, %v1509
    %v1815 = vpack.c.b16 %v1515, %v1510
    %v1816 = vpack.c.b16 %v1516, %v1511
    %v1817 = vpack.c.b16 %v1517, %v1512
    %v1818 = vpack.c.b16 %v1518, %v1513
    %v1819 = vpack.c.b16 %v1524, %v1519
    %v1820 = vpack.c.b16 %v1525, %v1520
    %v1821 = vpack.c.b16 %v1526, %v1521
    %v1822 = vpack.c.b16 %v1527, %v1522
    %v1823 = vpack.c.b16 %v1528, %v1523
    %v1824 = vpack.c.b16 %v1534, %v1529
    %v1825 = vpack.c.b16 %v1535, %v1530
    %v1826 = vpack.c.b16 %v1536, %v1531
    %v1827 = vpack.c.b16 %v1537, %v1532
    %v1828 = vpack.c.b16 %v1538, %v1533
    %v1829 = vpack.c.b16 %v1544, %v1539
    %v1830 = vpack.c.b16 %v1545, %v1540
    %v1831 = vpack.c.b16 %v1546, %v1541
    %v1832 = vpack.c.b16 %v1547, %v1542
    %v1833 = vpack.c.b16 %v1548, %v1543
    %v1834 = vpack.c.b16 %v1554, %v1549
    %v1835 = vpack.c.b16 %v1555, %v1550
    %v1836 = vpack.c.b16 %v1556, %v1551
    %v1837 = vpack.c.b16 %v1557, %v1552
    %v1838 = vpack.c.b16 %v1558, %v1553
    %v1839 = vpack.c.b16 %v1564, %v1559
    %v1840 = vpack.c.b16 %v1565, %v1560
    %v1841 = vpack.c.b16 %v1566, %v1561
    %v1842 = vpack.c.b16 %v1567, %v1562
    %v1843 = vpack.c.b16 %v1568, %v1563
    %v1844 = vpack.c.b16 %v1574, %v1569
    %v1845 = vpack.c.b16 %v1575, %v1570
    %v1846 = vpack.c.b16 %v1576, %v1571
    %v1847 = vpack.c.b16 %v1577, %v1572
    %v1848 = vpack.c.b16 %v1578, %v1573
    %v1849 = vpack.c.b16 %v1584, %v1579
    %v1850 = vpack.c.b16 %v1585, %v1580
    %v1851 = vpack.c.b16 %v1586, %v1581
    %v1852 = vpack.c.b16 %v1587, %v1582
    %v1853 = vpack.c.b16 %v1588, %v1583
    %v1854 = vpack.c.b16 %v1594, %v1589
    %v1855 = vpack.c.b16 %v1595, %v1590
    %v1856 = vpack.c.b16 %v1596, %v1591
    %v1857 = vpack.c.b16 %v1597, %v1592
    %v1858 = vpack.c.b16 %v1598, %v1593
    %v1859 = vpack.c.b16 %v1604, %v1599
    %v1860 = vpack.c.b16 %v1605, %v1600
    %v1861 = vpack.c.b16 %v1606, %v1601
    %v1862 = vpack.c.b16 %v1607, %v1602
    %v1863 = vpack.c.b16 %v1608, %v1603
    %v1864 = vpack.c.b16 %v1614, %v1609
    %v1865 = vpack.c.b16 %v1615, %v1610
    %v1866 = vpack.c.b16 %v1616, %v1611
    %v1867 = vpack.c.b16 %v1617, %v1612
    %v1868 = vpack.c.b16 %v1618, %v1613
    %vm2119 = vcmask 261120
    %v2121 = vsel %vm2119, %v491, 0
    %2123 = vmatprep.subr.bf16.mxu0 %v1620
    %2124 = vmatpush1.bf16.msra.mxu0 %v1619
    %2125 = vmatprep.subr.bf16.mxu0 %v1625
    %2126 = vmatpush1.bf16.msra.mxu0 %v1624
    %2127 = vmatprep.subr.bf16.mxu0 %v1630
    %2128 = vmatpush1.bf16.msra.mxu0 %v1629
    %2129 = vmatprep.subr.bf16.mxu0 %v1635
    %2130 = vmatpush1.bf16.msra.mxu0 %v1634
    %2131 = vmatprep.subr.bf16.mxu0 %v1640
    %2132 = vmatpush1.bf16.msra.mxu0 %v1639
    %2133 = vmatprep.subr.bf16.mxu0 %v1645
    %2134 = vmatpush1.bf16.msra.mxu0 %v1644
    %2135 = vmatprep.subr.bf16.mxu0 %v1650
    %2136 = vmatpush1.bf16.msra.mxu0 %v1649
    %2137 = vmatprep.subr.bf16.mxu0 %v1655
    %2138 = vmatpush1.bf16.msra.mxu0 %v1654
    %2139 = vmatprep.subr.bf16.mxu0 %v1660
    %2140 = vmatpush1.bf16.msra.mxu0 %v1659
    %2141 = vmatprep.subr.bf16.mxu0 %v1665
    %2142 = vmatpush1.bf16.msra.mxu0 %v1664
    %2143 = vmatprep.subr.bf16.mxu0 %v1670
    %2144 = vmatpush1.bf16.msra.mxu0 %v1669
    %2145 = vmatprep.subr.bf16.mxu0 %v1675
    %2146 = vmatpush1.bf16.msra.mxu0 %v1674
    %2147 = vmatprep.subr.bf16.mxu0 %v1680
    %2148 = vmatpush1.bf16.msra.mxu0 %v1679
    %2149 = vmatprep.subr.bf16.mxu0 %v1685
    %2150 = vmatpush1.bf16.msra.mxu0 %v1684
    %2151 = vmatprep.subr.bf16.mxu0 %v1690
    %2152 = vmatpush1.bf16.msra.mxu0 %v1689
    %2153 = vmatprep.subr.bf16.mxu0 %v1695
    %2154 = vmatpush1.bf16.msra.mxu0 %v1694
    %2155 = vmatprep.mubr.bf16.mxu0 %v486
    %2156 = vmatmul.mubr.bf16.gmra.mrb[0].mxu0 %v485
    %v2157 = vpop.f32.mrb[0].mxu0
    %v2158 = vadd.f32 %v797, %v2157
    %v2159 = vpop.f32.mrb[0].mxu0
    %v2160 = vadd.f32 %v801, %v2159
    %v2161 = vpop.f32.mrb[0].mxu0
    %v2162 = vadd.f32 %v797, %v2161
    %v2163 = vpop.f32.mrb[0].mxu0
    %v2164 = vadd.f32 %v801, %v2163
    %2165 = vdwg.mxu0
    %2166 = vmatprep.subr.bf16.mxu0 %v1700
    %2167 = vmatpush1.bf16.msra.mxu0 %v1699
    %2168 = vmatprep.subr.bf16.mxu0 %v1705
    %2169 = vmatpush1.bf16.msra.mxu0 %v1704
    %2170 = vmatprep.subr.bf16.mxu0 %v1710
    %2171 = vmatpush1.bf16.msra.mxu0 %v1709
    %2172 = vmatprep.subr.bf16.mxu0 %v1715
    %2173 = vmatpush1.bf16.msra.mxu0 %v1714
    %2174 = vmatprep.subr.bf16.mxu0 %v1720
    %2175 = vmatpush1.bf16.msra.mxu0 %v1719
    %2176 = vmatprep.subr.bf16.mxu0 %v1725
    %2177 = vmatpush1.bf16.msra.mxu0 %v1724
    %2178 = vmatprep.subr.bf16.mxu0 %v1730
    %2179 = vmatpush1.bf16.msra.mxu0 %v1729
    %2180 = vmatprep.subr.bf16.mxu0 %v1735
    %2181 = vmatpush1.bf16.msra.mxu0 %v1734
    %2182 = vmatprep.subr.bf16.mxu0 %v1740
    %2183 = vmatpush1.bf16.msra.mxu0 %v1739
    %2184 = vmatprep.subr.bf16.mxu0 %v1745
    %2185 = vmatpush1.bf16.msra.mxu0 %v1744
    %2186 = vmatprep.subr.bf16.mxu0 %v1750
    %2187 = vmatpush1.bf16.msra.mxu0 %v1749
    %2188 = vmatprep.subr.bf16.mxu0 %v1755
    %2189 = vmatpush1.bf16.msra.mxu0 %v1754
    %2190 = vmatprep.subr.bf16.mxu0 %v1760
    %2191 = vmatpush1.bf16.msra.mxu0 %v1759
    %2192 = vmatprep.subr.bf16.mxu0 %v1765
    %2193 = vmatpush1.bf16.msra.mxu0 %v1764
    %2194 = vmatprep.subr.bf16.mxu0 %v1770
    %2195 = vmatpush1.bf16.msra.mxu0 %v1769
    %2196 = vmatprep.subr.bf16.mxu0 %v1775
    %2197 = vmatpush1.bf16.msra.mxu0 %v1774
    %2198 = vmatprep.mubr.bf16.mxu0 %v488
    %2199 = vmatmul.mubr.bf16.gmra.mrb[0].mxu0 %v487
    %v2200 = vpop.f32.mrb[0].mxu0
    %v2201 = vadd.f32 %v2158, %v2200
    %v2202 = vpop.f32.mrb[0].mxu0
    %v2203 = vadd.f32 %v2160, %v2202
    %v2204 = vpop.f32.mrb[0].mxu0
    %v2205 = vadd.f32 %v2162, %v2204
    %v2206 = vpop.f32.mrb[0].mxu0
    %v2207 = vadd.f32 %v2164, %v2206
    %2208 = vdwg.mxu0
    %2209 = vmatprep.subr.bf16.mxu0 %v1780
    %2210 = vmatpush1.bf16.msra.mxu0 %v1779
    %2211 = vmatprep.subr.bf16.mxu0 %v1785
    %2212 = vmatpush1.bf16.msra.mxu0 %v1784
    %2213 = vmatprep.subr.bf16.mxu0 %v1790
    %2214 = vmatpush1.bf16.msra.mxu0 %v1789
    %2215 = vmatprep.subr.bf16.mxu0 %v1795
    %2216 = vmatpush1.bf16.msra.mxu0 %v1794
    %2217 = vmatprep.subr.bf16.mxu0 %v1800
    %2218 = vmatpush1.bf16.msra.mxu0 %v1799
    %2219 = vmatprep.subr.bf16.mxu0 %v1805
    %2220 = vmatpush1.bf16.msra.mxu0 %v1804
    %2221 = vmatprep.subr.bf16.mxu0 %v1810
    %2222 = vmatpush1.bf16.msra.mxu0 %v1809
    %2223 = vmatprep.subr.bf16.mxu0 %v1815
    %2224 = vmatpush1.bf16.msra.mxu0 %v1814
    %2225 = vmatprep.subr.bf16.mxu0 %v1820
    %2226 = vmatpush1.bf16.msra.mxu0 %v1819
    %2227 = vmatprep.subr.bf16.mxu0 %v1825
    %2228 = vmatpush1.bf16.msra.mxu0 %v1824
    %2229 = vmatprep.subr.bf16.mxu0 %v1830
    %2230 = vmatpush1.bf16.msra.mxu0 %v1829
    %2231 = vmatprep.subr.bf16.mxu0 %v1835
    %2232 = vmatpush1.bf16.msra.mxu0 %v1834
    %2233 = vmatprep.subr.bf16.mxu0 %v1840
    %2234 = vmatpush1.bf16.msra.mxu0 %v1839
    %2235 = vmatprep.subr.bf16.mxu0 %v1845
    %2236 = vmatpush1.bf16.msra.mxu0 %v1844
    %2237 = vmatprep.subr.bf16.mxu0 %v1850
    %2238 = vmatpush1.bf16.msra.mxu0 %v1849
    %2239 = vmatprep.subr.bf16.mxu0 %v1855
    %2240 = vmatpush1.bf16.msra.mxu0 %v1854
    %2241 = vmatprep.mubr.bf16.mxu0 %v490
    %2242 = vmatmul.mubr.bf16.gmra.mrb[0].mxu0 %v489
    %v2243 = vpop.f32.mrb[0].mxu0
    %v2244 = vadd.f32 %v2201, %v2243
    %v2245 = vpop.f32.mrb[0].mxu0
    %v2246 = vadd.f32 %v2203, %v2245
    %v2247 = vpop.f32.mrb[0].mxu0
    %v2248 = vadd.f32 %v2205, %v2247
    %v2249 = vpop.f32.mrb[0].mxu0
    %v2250 = vadd.f32 %v2207, %v2249
    %2251 = vdwg.mxu0
    %2252 = vmatprep.subr.bf16.mxu0 %v1860
    %2253 = vmatpush1.bf16.msra.mxu0 %v1859
    %2254 = vmatprep.subr.bf16.mxu0 %v1865
    %2255 = vmatpush1.bf16.msra.mxu0 %v1864
    %2256 = vmatprep.subr.bf16.mxu0 0
    %2257 = vmatpush1.bf16.msra.mxu0 0
    %2258 = vmatprep.subr.bf16.mxu0 0
    %2259 = vmatpush1.bf16.msra.mxu0 0
    %2260 = vmatprep.subr.bf16.mxu0 0
    %2261 = vmatpush1.bf16.msra.mxu0 0
    %2262 = vmatprep.subr.bf16.mxu0 0
    %2263 = vmatpush1.bf16.msra.mxu0 0
    %2264 = vmatprep.subr.bf16.mxu0 0
    %2265 = vmatpush1.bf16.msra.mxu0 0
    %2266 = vmatprep.subr.bf16.mxu0 0
    %2267 = vmatpush1.bf16.msra.mxu0 0
    %2268 = vmatprep.subr.bf16.mxu0 0
    %2269 = vmatpush1.bf16.msra.mxu0 0
    %2270 = vmatprep.subr.bf16.mxu0 0
    %2271 = vmatpush1.bf16.msra.mxu0 0
    %2272 = vmatprep.subr.bf16.mxu0 0
    %2273 = vmatpush1.bf16.msra.mxu0 0
    %2274 = vmatprep.subr.bf16.mxu0 0
    %2275 = vmatpush1.bf16.msra.mxu0 0
    %2276 = vmatprep.subr.bf16.mxu0 0
    %2277 = vmatpush1.bf16.msra.mxu0 0
    %2278 = vmatprep.subr.bf16.mxu0 0
    %2279 = vmatpush1.bf16.msra.mxu0 0
    %2280 = vmatprep.subr.bf16.mxu0 0
    %2281 = vmatpush1.bf16.msra.mxu0 0
    %2282 = vmatprep.subr.bf16.mxu0 0
    %2283 = vmatpush1.bf16.msra.mxu0 0
    %2284 = vmatprep.mubr.bf16.mxu0 0
    %2285 = vmatmul.mubr.bf16.gmra.mrb[0].mxu0 %v2121
    %v2286 = vpop.f32.mrb[0].mxu0
    %v2287 = vadd.f32 %v2244, %v2286
    %v2288 = vpop.f32.mrb[0].mxu0
    %v2289 = vadd.f32 %v2246, %v2288
    %v2290 = vpop.f32.mrb[0].mxu0
    %v2291 = vadd.f32 %v2248, %v2290
    %v2292 = vpop.f32.mrb[0].mxu0
    %v2293 = vadd.f32 %v2250, %v2292
    %2294 = vdwg.mxu0
    %2295 = vmatprep.subr.bf16.mxu0 %v1622
    %2296 = vmatpush1.bf16.msra.mxu0 %v1621
    %2297 = vmatprep.subr.bf16.mxu0 %v1627
    %2298 = vmatpush1.bf16.msra.mxu0 %v1626
    %2299 = vmatprep.subr.bf16.mxu0 %v1632
    %2300 = vmatpush1.bf16.msra.mxu0 %v1631
    %2301 = vmatprep.subr.bf16.mxu0 %v1637
    %2302 = vmatpush1.bf16.msra.mxu0 %v1636
    %2303 = vmatprep.subr.bf16.mxu0 %v1642
    %2304 = vmatpush1.bf16.msra.mxu0 %v1641
    %2305 = vmatprep.subr.bf16.mxu0 %v1647
    %2306 = vmatpush1.bf16.msra.mxu0 %v1646
    %2307 = vmatprep.subr.bf16.mxu0 %v1652
    %2308 = vmatpush1.bf16.msra.mxu0 %v1651
    %2309 = vmatprep.subr.bf16.mxu0 %v1657
    %2310 = vmatpush1.bf16.msra.mxu0 %v1656
    %2311 = vmatprep.subr.bf16.mxu0 %v1662
    %2312 = vmatpush1.bf16.msra.mxu0 %v1661
    %2313 = vmatprep.subr.bf16.mxu0 %v1667
    %2314 = vmatpush1.bf16.msra.mxu0 %v1666
    %2315 = vmatprep.subr.bf16.mxu0 %v1672
    %2316 = vmatpush1.bf16.msra.mxu0 %v1671
    %2317 = vmatprep.subr.bf16.mxu0 %v1677
    %2318 = vmatpush1.bf16.msra.mxu0 %v1676
    %2319 = vmatprep.subr.bf16.mxu0 %v1682
    %2320 = vmatpush1.bf16.msra.mxu0 %v1681
    %2321 = vmatprep.subr.bf16.mxu0 %v1687
    %2322 = vmatpush1.bf16.msra.mxu0 %v1686
    %2323 = vmatprep.subr.bf16.mxu0 %v1692
    %2324 = vmatpush1.bf16.msra.mxu0 %v1691
    %2325 = vmatprep.subr.bf16.mxu0 %v1697
    %2326 = vmatpush1.bf16.msra.mxu0 %v1696
    %2327 = vmatprep.mubr.bf16.mxu0 %v486
    %2328 = vmatmul.mubr.bf16.gmra.mrb[0].mxu0 %v485
    %v2329 = vpop.f32.mrb[0].mxu0
    %v2330 = vadd.f32 %v805, %v2329
    %v2331 = vpop.f32.mrb[0].mxu0
    %v2332 = vadd.f32 %v809, %v2331
    %v2333 = vpop.f32.mrb[0].mxu0
    %v2334 = vadd.f32 %v805, %v2333
    %v2335 = vpop.f32.mrb[0].mxu0
    %v2336 = vadd.f32 %v809, %v2335
    %2337 = vdwg.mxu0
    %2338 = vmatprep.subr.bf16.mxu0 %v1702
    %2339 = vmatpush1.bf16.msra.mxu0 %v1701
    %2340 = vmatprep.subr.bf16.mxu0 %v1707
    %2341 = vmatpush1.bf16.msra.mxu0 %v1706
    %2342 = vmatprep.subr.bf16.mxu0 %v1712
    %2343 = vmatpush1.bf16.msra.mxu0 %v1711
    %2344 = vmatprep.subr.bf16.mxu0 %v1717
    %2345 = vmatpush1.bf16.msra.mxu0 %v1716
    %2346 = vmatprep.subr.bf16.mxu0 %v1722
    %2347 = vmatpush1.bf16.msra.mxu0 %v1721
    %2348 = vmatprep.subr.bf16.mxu0 %v1727
    %2349 = vmatpush1.bf16.msra.mxu0 %v1726
    %2350 = vmatprep.subr.bf16.mxu0 %v1732
    %2351 = vmatpush1.bf16.msra.mxu0 %v1731
    %2352 = vmatprep.subr.bf16.mxu0 %v1737
    %2353 = vmatpush1.bf16.msra.mxu0 %v1736
    %2354 = vmatprep.subr.bf16.mxu0 %v1742
    %2355 = vmatpush1.bf16.msra.mxu0 %v1741
    %2356 = vmatprep.subr.bf16.mxu0 %v1747
    %2357 = vmatpush1.bf16.msra.mxu0 %v1746
    %2358 = vmatprep.subr.bf16.mxu0 %v1752
    %2359 = vmatpush1.bf16.msra.mxu0 %v1751
    %2360 = vmatprep.subr.bf16.mxu0 %v1757
    %2361 = vmatpush1.bf16.msra.mxu0 %v1756
    %2362 = vmatprep.subr.bf16.mxu0 %v1762
    %2363 = vmatpush1.bf16.msra.mxu0 %v1761
    %2364 = vmatprep.subr.bf16.mxu0 %v1767
    %2365 = vmatpush1.bf16.msra.mxu0 %v1766
    %2366 = vmatprep.subr.bf16.mxu0 %v1772
    %2367 = vmatpush1.bf16.msra.mxu0 %v1771
    %2368 = vmatprep.subr.bf16.mxu0 %v1777
    %2369 = vmatpush1.bf16.msra.mxu0 %v1776
    %2370 = vmatprep.mubr.bf16.mxu0 %v488
    %2371 = vmatmul.mubr.bf16.gmra.mrb[0].mxu0 %v487
    %v2372 = vpop.f32.mrb[0].mxu0
    %v2373 = vadd.f32 %v2330, %v2372
    %v2374 = vpop.f32.mrb[0].mxu0
    %v2375 = vadd.f32 %v2332, %v2374
    %v2376 = vpop.f32.mrb[0].mxu0
    %v2377 = vadd.f32 %v2334, %v2376
    %v2378 = vpop.f32.mrb[0].mxu0
    %v2379 = vadd.f32 %v2336, %v2378
    %2380 = vdwg.mxu0
    %2381 = vmatprep.subr.bf16.mxu0 %v1782
    %2382 = vmatpush1.bf16.msra.mxu0 %v1781
    %2383 = vmatprep.subr.bf16.mxu0 %v1787
    %2384 = vmatpush1.bf16.msra.mxu0 %v1786
    %2385 = vmatprep.subr.bf16.mxu0 %v1792
    %2386 = vmatpush1.bf16.msra.mxu0 %v1791
    %2387 = vmatprep.subr.bf16.mxu0 %v1797
    %2388 = vmatpush1.bf16.msra.mxu0 %v1796
    %2389 = vmatprep.subr.bf16.mxu0 %v1802
    %2390 = vmatpush1.bf16.msra.mxu0 %v1801
    %2391 = vmatprep.subr.bf16.mxu0 %v1807
    %2392 = vmatpush1.bf16.msra.mxu0 %v1806
    %2393 = vmatprep.subr.bf16.mxu0 %v1812
    %2394 = vmatpush1.bf16.msra.mxu0 %v1811
    %2395 = vmatprep.subr.bf16.mxu0 %v1817
    %2396 = vmatpush1.bf16.msra.mxu0 %v1816
    %2397 = vmatprep.subr.bf16.mxu0 %v1822
    %2398 = vmatpush1.bf16.msra.mxu0 %v1821
    %2399 = vmatprep.subr.bf16.mxu0 %v1827
    %2400 = vmatpush1.bf16.msra.mxu0 %v1826
    %2401 = vmatprep.subr.bf16.mxu0 %v1832
    %2402 = vmatpush1.bf16.msra.mxu0 %v1831
    %2403 = vmatprep.subr.bf16.mxu0 %v1837
    %2404 = vmatpush1.bf16.msra.mxu0 %v1836
    %2405 = vmatprep.subr.bf16.mxu0 %v1842
    %2406 = vmatpush1.bf16.msra.mxu0 %v1841
    %2407 = vmatprep.subr.bf16.mxu0 %v1847
    %2408 = vmatpush1.bf16.msra.mxu0 %v1846
    %2409 = vmatprep.subr.bf16.mxu0 %v1852
    %2410 = vmatpush1.bf16.msra.mxu0 %v1851
    %2411 = vmatprep.subr.bf16.mxu0 %v1857
    %2412 = vmatpush1.bf16.msra.mxu0 %v1856
    %2413 = vmatprep.mubr.bf16.mxu0 %v490
    %2414 = vmatmul.mubr.bf16.gmra.mrb[0].mxu0 %v489
    %v2415 = vpop.f32.mrb[0].mxu0
    %v2416 = vadd.f32 %v2373, %v2415
    %v2417 = vpop.f32.mrb[0].mxu0
    %v2418 = vadd.f32 %v2375, %v2417
    %v2419 = vpop.f32.mrb[0].mxu0
    %v2420 = vadd.f32 %v2377, %v2419
    %v2421 = vpop.f32.mrb[0].mxu0
    %v2422 = vadd.f32 %v2379, %v2421
    %2423 = vdwg.mxu0
    %2424 = vmatprep.subr.bf16.mxu0 %v1862
    %2425 = vmatpush1.bf16.msra.mxu0 %v1861
    %2426 = vmatprep.subr.bf16.mxu0 %v1867
    %2427 = vmatpush1.bf16.msra.mxu0 %v1866
    %2428 = vmatprep.subr.bf16.mxu0 0
    %2429 = vmatpush1.bf16.msra.mxu0 0
    %2430 = vmatprep.subr.bf16.mxu0 0
    %2431 = vmatpush1.bf16.msra.mxu0 0
    %2432 = vmatprep.subr.bf16.mxu0 0
    %2433 = vmatpush1.bf16.msra.mxu0 0
    %2434 = vmatprep.subr.bf16.mxu0 0
    %2435 = vmatpush1.bf16.msra.mxu0 0
    %2436 = vmatprep.subr.bf16.mxu0 0
    %2437 = vmatpush1.bf16.msra.mxu0 0
    %2438 = vmatprep.subr.bf16.mxu0 0
    %2439 = vmatpush1.bf16.msra.mxu0 0
    %2440 = vmatprep.subr.bf16.mxu0 0
    %2441 = vmatpush1.bf16.msra.mxu0 0
    %2442 = vmatprep.subr.bf16.mxu0 0
    %2443 = vmatpush1.bf16.msra.mxu0 0
    %2444 = vmatprep.subr.bf16.mxu0 0
    %2445 = vmatpush1.bf16.msra.mxu0 0
    %2446 = vmatprep.subr.bf16.mxu0 0
    %2447 = vmatpush1.bf16.msra.mxu0 0
    %2448 = vmatprep.subr.bf16.mxu0 0
    %2449 = vmatpush1.bf16.msra.mxu0 0
    %2450 = vmatprep.subr.bf16.mxu0 0
    %2451 = vmatpush1.bf16.msra.mxu0 0
    %2452 = vmatprep.subr.bf16.mxu0 0
    %2453 = vmatpush1.bf16.msra.mxu0 0
    %2454 = vmatprep.subr.bf16.mxu0 0
    %2455 = vmatpush1.bf16.msra.mxu0 0
    %2456 = vmatprep.mubr.bf16.mxu0 0
    %2457 = vmatmul.mubr.bf16.gmra.mrb[0].mxu0 %v2121
    %v2458 = vpop.f32.mrb[0].mxu0
    %v2459 = vadd.f32 %v2416, %v2458
    %v2460 = vpop.f32.mrb[0].mxu0
    %v2461 = vadd.f32 %v2418, %v2460
    %v2462 = vpop.f32.mrb[0].mxu0
    %v2463 = vadd.f32 %v2420, %v2462
    %v2464 = vpop.f32.mrb[0].mxu0
    %v2465 = vadd.f32 %v2422, %v2464
    %2466 = vdwg.mxu0
    %2467 = vmatprep.subr.bf16.mxu0 0
    %2468 = vmatpush1.bf16.msra.mxu0 %v1623
    %2469 = vmatprep.subr.bf16.mxu0 0
    %2470 = vmatpush1.bf16.msra.mxu0 %v1628
    %2471 = vmatprep.subr.bf16.mxu0 0
    %2472 = vmatpush1.bf16.msra.mxu0 %v1633
    %2473 = vmatprep.subr.bf16.mxu0 0
    %2474 = vmatpush1.bf16.msra.mxu0 %v1638
    %2475 = vmatprep.subr.bf16.mxu0 0
    %2476 = vmatpush1.bf16.msra.mxu0 %v1643
    %2477 = vmatprep.subr.bf16.mxu0 0
    %2478 = vmatpush1.bf16.msra.mxu0 %v1648
    %2479 = vmatprep.subr.bf16.mxu0 0
    %2480 = vmatpush1.bf16.msra.mxu0 %v1653
    %2481 = vmatprep.subr.bf16.mxu0 0
    %2482 = vmatpush1.bf16.msra.mxu0 %v1658
    %2483 = vmatprep.subr.bf16.mxu0 0
    %2484 = vmatpush1.bf16.msra.mxu0 %v1663
    %2485 = vmatprep.subr.bf16.mxu0 0
    %2486 = vmatpush1.bf16.msra.mxu0 %v1668
    %2487 = vmatprep.subr.bf16.mxu0 0
    %2488 = vmatpush1.bf16.msra.mxu0 %v1673
    %2489 = vmatprep.subr.bf16.mxu0 0
    %2490 = vmatpush1.bf16.msra.mxu0 %v1678
    %2491 = vmatprep.subr.bf16.mxu0 0
    %2492 = vmatpush1.bf16.msra.mxu0 %v1683
    %2493 = vmatprep.subr.bf16.mxu0 0
    %2494 = vmatpush1.bf16.msra.mxu0 %v1688
    %2495 = vmatprep.subr.bf16.mxu0 0
    %2496 = vmatpush1.bf16.msra.mxu0 %v1693
    %2497 = vmatprep.subr.bf16.mxu0 0
    %2498 = vmatpush1.bf16.msra.mxu0 %v1698
    %2499 = vmatprep.mubr.bf16.mxu0 %v486
    %2500 = vmatmul.mubr.bf16.gmra.mrb[0].mxu0 %v485
    %v2501 = vpop.f32.mrb[0].mxu0
    %v2502 = vadd.f32 %v813, %v2501
    %v2503 = vpop.f32.mrb[0].mxu0
    %v2504 = vpop.f32.mrb[0].mxu0
    %v2505 = vadd.f32 %v813, %v2504
    %v2506 = vpop.f32.mrb[0].mxu0
    %2507 = vdwg.mxu0
    %2508 = vmatprep.subr.bf16.mxu0 0
    %2509 = vmatpush1.bf16.msra.mxu0 %v1703
    %2510 = vmatprep.subr.bf16.mxu0 0
    %2511 = vmatpush1.bf16.msra.mxu0 %v1708
    %2512 = vmatprep.subr.bf16.mxu0 0
    %2513 = vmatpush1.bf16.msra.mxu0 %v1713
    %2514 = vmatprep.subr.bf16.mxu0 0
    %2515 = vmatpush1.bf16.msra.mxu0 %v1718
    %2516 = vmatprep.subr.bf16.mxu0 0
    %2517 = vmatpush1.bf16.msra.mxu0 %v1723
    %2518 = vmatprep.subr.bf16.mxu0 0
    %2519 = vmatpush1.bf16.msra.mxu0 %v1728
    %2520 = vmatprep.subr.bf16.mxu0 0
    %2521 = vmatpush1.bf16.msra.mxu0 %v1733
    %2522 = vmatprep.subr.bf16.mxu0 0
    %2523 = vmatpush1.bf16.msra.mxu0 %v1738
    %2524 = vmatprep.subr.bf16.mxu0 0
    %2525 = vmatpush1.bf16.msra.mxu0 %v1743
    %2526 = vmatprep.subr.bf16.mxu0 0
    %2527 = vmatpush1.bf16.msra.mxu0 %v1748
    %2528 = vmatprep.subr.bf16.mxu0 0
    %2529 = vmatpush1.bf16.msra.mxu0 %v1753
    %2530 = vmatprep.subr.bf16.mxu0 0
    %2531 = vmatpush1.bf16.msra.mxu0 %v1758
    %2532 = vmatprep.subr.bf16.mxu0 0
    %2533 = vmatpush1.bf16.msra.mxu0 %v1763
    %2534 = vmatprep.subr.bf16.mxu0 0
    %2535 = vmatpush1.bf16.msra.mxu0 %v1768
    %2536 = vmatprep.subr.bf16.mxu0 0
    %2537 = vmatpush1.bf16.msra.mxu0 %v1773
    %2538 = vmatprep.subr.bf16.mxu0 0
    %2539 = vmatpush1.bf16.msra.mxu0 %v1778
    %2540 = vmatprep.mubr.bf16.mxu0 %v488
    %2541 = vmatmul.mubr.bf16.gmra.mrb[0].mxu0 %v487
    %v2542 = vpop.f32.mrb[0].mxu0
    %v2543 = vadd.f32 %v2502, %v2542
    %v2544 = vpop.f32.mrb[0].mxu0
    %v2545 = vpop.f32.mrb[0].mxu0
    %v2546 = vadd.f32 %v2505, %v2545
    %v2547 = vpop.f32.mrb[0].mxu0
    %2548 = vdwg.mxu0
    %2549 = vmatprep.subr.bf16.mxu0 0
    %2550 = vmatpush1.bf16.msra.mxu0 %v1783
    %2551 = vmatprep.subr.bf16.mxu0 0
    %2552 = vmatpush1.bf16.msra.mxu0 %v1788
    %2553 = vmatprep.subr.bf16.mxu0 0
    %2554 = vmatpush1.bf16.msra.mxu0 %v1793
    %2555 = vmatprep.subr.bf16.mxu0 0
    %2556 = vmatpush1.bf16.msra.mxu0 %v1798
    %2557 = vmatprep.subr.bf16.mxu0 0
    %2558 = vmatpush1.bf16.msra.mxu0 %v1803
    %2559 = vmatprep.subr.bf16.mxu0 0
    %2560 = vmatpush1.bf16.msra.mxu0 %v1808
    %2561 = vmatprep.subr.bf16.mxu0 0
    %2562 = vmatpush1.bf16.msra.mxu0 %v1813
    %2563 = vmatprep.subr.bf16.mxu0 0
    %2564 = vmatpush1.bf16.msra.mxu0 %v1818
    %2565 = vmatprep.subr.bf16.mxu0 0
    %2566 = vmatpush1.bf16.msra.mxu0 %v1823
    %2567 = vmatprep.subr.bf16.mxu0 0
    %2568 = vmatpush1.bf16.msra.mxu0 %v1828
    %2569 = vmatprep.subr.bf16.mxu0 0
    %2570 = vmatpush1.bf16.msra.mxu0 %v1833
    %2571 = vmatprep.subr.bf16.mxu0 0
    %2572 = vmatpush1.bf16.msra.mxu0 %v1838
    %2573 = vmatprep.subr.bf16.mxu0 0
    %2574 = vmatpush1.bf16.msra.mxu0 %v1843
    %2575 = vmatprep.subr.bf16.mxu0 0
    %2576 = vmatpush1.bf16.msra.mxu0 %v1848
    %2577 = vmatprep.subr.bf16.mxu0 0
    %2578 = vmatpush1.bf16.msra.mxu0 %v1853
    %2579 = vmatprep.subr.bf16.mxu0 0
    %2580 = vmatpush1.bf16.msra.mxu0 %v1858
    %2581 = vmatprep.mubr.bf16.mxu0 %v490
    %2582 = vmatmul.mubr.bf16.gmra.mrb[0].mxu0 %v489
    %v2583 = vpop.f32.mrb[0].mxu0
    %v2584 = vadd.f32 %v2543, %v2583
    %v2585 = vpop.f32.mrb[0].mxu0
    %v2586 = vpop.f32.mrb[0].mxu0
    %v2587 = vadd.f32 %v2546, %v2586
    %v2588 = vpop.f32.mrb[0].mxu0
    %2589 = vdwg.mxu0
    %2590 = vmatprep.subr.bf16.mxu0 0
    %2591 = vmatpush1.bf16.msra.mxu0 %v1863
    %2592 = vmatprep.subr.bf16.mxu0 0
    %2593 = vmatpush1.bf16.msra.mxu0 %v1868
    %2594 = vmatprep.subr.bf16.mxu0 0
    %2595 = vmatpush1.bf16.msra.mxu0 0
    %2596 = vmatprep.subr.bf16.mxu0 0
    %2597 = vmatpush1.bf16.msra.mxu0 0
    %2598 = vmatprep.subr.bf16.mxu0 0
    %2599 = vmatpush1.bf16.msra.mxu0 0
    %2600 = vmatprep.subr.bf16.mxu0 0
    %2601 = vmatpush1.bf16.msra.mxu0 0
    %2602 = vmatprep.subr.bf16.mxu0 0
    %2603 = vmatpush1.bf16.msra.mxu0 0
    %2604 = vmatprep.subr.bf16.mxu0 0
    %2605 = vmatpush1.bf16.msra.mxu0 0
    %2606 = vmatprep.subr.bf16.mxu0 0
    %2607 = vmatpush1.bf16.msra.mxu0 0
    %2608 = vmatprep.subr.bf16.mxu0 0
    %2609 = vmatpush1.bf16.msra.mxu0 0
    %2610 = vmatprep.subr.bf16.mxu0 0
    %2611 = vmatpush1.bf16.msra.mxu0 0
    %2612 = vmatprep.subr.bf16.mxu0 0
    %2613 = vmatpush1.bf16.msra.mxu0 0
    %2614 = vmatprep.subr.bf16.mxu0 0
    %2615 = vmatpush1.bf16.msra.mxu0 0
    %2616 = vmatprep.subr.bf16.mxu0 0
    %2617 = vmatpush1.bf16.msra.mxu0 0
    %2618 = vmatprep.subr.bf16.mxu0 0
    %2619 = vmatpush1.bf16.msra.mxu0 0
    %2620 = vmatprep.subr.bf16.mxu0 0
    %2621 = vmatpush1.bf16.msra.mxu0 0
    %2622 = vmatprep.mubr.bf16.mxu0 0
    %2623 = vmatmul.mubr.bf16.gmra.mrb[0].mxu0 %v2121
    %v2624 = vpop.f32.mrb[0].mxu0
    %v2625 = vadd.f32 %v2584, %v2624
    %v2626 = vpop.f32.mrb[0].mxu0
    %v2627 = vpop.f32.mrb[0].mxu0
    %v2628 = vadd.f32 %v2587, %v2627
    %v2629 = vpop.f32.mrb[0].mxu0
    %2630 = vdwg.mxu0
    %v2631 = vmax.f32 %v2287, 0.0
    %v2632 = vmax.f32 %v2289, 0.0
    %v2633 = vmax.f32 %v2459, 0.0
    %v2634 = vmax.f32 %v2461, 0.0
    %v2635 = vmax.f32 %v2625, 0.0
    %v2636 = vmax.f32 %v2291, 0.0
    %v2637 = vmax.f32 %v2293, 0.0
    %v2638 = vmax.f32 %v2463, 0.0
    %v2639 = vmax.f32 %v2465, 0.0
    %v2640 = vmax.f32 %v2628, 0.0
    %v2641 = vld [vmem:[%s5] sm:$0x1f]
    %v2642 = vpack.c.bf16 %v2636, %v2631
    %v2643 = vpack.c.bf16 %v2637, %v2632
    %v2644 = vpack.c.bf16 %v2638, %v2633
    %v2645 = vpack.c.bf16 %v2639, %v2634
    %v2646 = vpack.c.bf16 %v2640, %v2635
    %v2647 = vld [vmem:[%s6] sm:$0x3]
    %2649 = vset.pattern.permute.xlu0 0
    %2650 = vperm.xlu0 %2649, %v2647
    %v2651 = vpop.permute.xlu0 %2650
    %v2654 = vcombine.high %v2641, %v2641
    %v2656 = vunpack.c.l.s4 1966171168
    %v2657 = vunpack.c.0.s8 %v2656
    %v2658 = vlaneseq
    %v2659 = vshrl.u32 %v2658, 7
    %v2660 = vsub.s32 %v2657, %v2659
    %v2661 = vrot.slane %v2641, %v2660
    %v2663 = vunpack.c.l.s4 1966171168
    %v2664 = vunpack.c.0.s8 %v2663
    %v2665 = vlaneseq
    %v2666 = vshrl.u32 %v2665, 7
    %v2667 = vsub.s32 %v2664, %v2666
    %v2668 = vrot.slane %v2654, %v2667
    %v2669 = vcombine.high %v2661, %v2661
    %v2671 = vunpack.c.l.s4 1966171168
    %v2672 = vunpack.c.0.s8 %v2671
    %v2673 = vlaneseq
    %v2674 = vshrl.u32 %v2673, 7
    %v2675 = vsub.s32 %v2672, %v2674
    %v2676 = vrot.slane %v2661, %v2675
    %v2678 = vunpack.c.l.s4 1966171168
    %v2679 = vunpack.c.0.s8 %v2678
    %v2680 = vlaneseq
    %v2681 = vshrl.u32 %v2680, 7
    %v2682 = vsub.s32 %v2679, %v2681
    %v2683 = vrot.slane %v2668, %v2682
    %v2685 = vunpack.c.l.s4 1966171168
    %v2686 = vunpack.c.0.s8 %v2685
    %v2687 = vlaneseq
    %v2688 = vshrl.u32 %v2687, 7
    %v2689 = vsub.s32 %v2686, %v2688
    %v2690 = vrot.slane %v2669, %v2689
    %v2691 = vcombine.high %v2676, %v2676
    %v2692 = vcombine.high %v2690, %v2690
    %vm2697 = vcmask 719872
    %v2699 = vsel %vm2697, %v2683, 0
    %v2702 = vsel %vm2697, %v2646, 0
    %2704 = vmatprep.subr.bf16.mxu0 %v2643
    %2705 = vmatpush1.bf16.xpose.msra.mxu0 %v2642
    %2706 = vmatprep.subr.bf16.mxu0 0
    %2707 = vmatpush1.bf16.xpose.msra.mxu0 0
    %2708 = vmatprep.subr.bf16.mxu0 0
    %2709 = vmatpush1.bf16.xpose.msra.mxu0 0
    %2710 = vmatprep.subr.bf16.mxu0 0
    %2711 = vmatpush1.bf16.xpose.msra.mxu0 0
    %2712 = vmatprep.subr.bf16.mxu0 0
    %2713 = vmatpush1.bf16.xpose.msra.mxu0 0
    %2714 = vmatprep.subr.bf16.mxu0 0
    %2715 = vmatpush1.bf16.xpose.msra.mxu0 0
    %2716 = vmatprep.subr.bf16.mxu0 0
    %2717 = vmatpush1.bf16.xpose.msra.mxu0 0
    %2718 = vmatprep.subr.bf16.mxu0 0
    %2719 = vmatpush1.bf16.xpose.msra.mxu0 0
    %2720 = vmatprep.subr.bf16.mxu0 0
    %2721 = vmatpush1.bf16.xpose.msra.mxu0 0
    %2722 = vmatprep.subr.bf16.mxu0 0
    %2723 = vmatpush1.bf16.xpose.msra.mxu0 0
    %2724 = vmatprep.subr.bf16.mxu0 0
    %2725 = vmatpush1.bf16.xpose.msra.mxu0 0
    %2726 = vmatprep.subr.bf16.mxu0 0
    %2727 = vmatpush1.bf16.xpose.msra.mxu0 0
    %2728 = vmatprep.subr.bf16.mxu0 0
    %2729 = vmatpush1.bf16.xpose.msra.mxu0 0
    %2730 = vmatprep.subr.bf16.mxu0 0
    %2731 = vmatpush1.bf16.xpose.msra.mxu0 0
    %2732 = vmatprep.subr.bf16.mxu0 0
    %2733 = vmatpush1.bf16.xpose.msra.mxu0 0
    %2734 = vmatprep.subr.bf16.mxu0 0
    %2735 = vmatpush1.bf16.xpose.msra.mxu0 0
    %2736 = vmatprep.mubr.bf16.mxu0 %v2690
    %2737 = vmatmul.mubr.bf16.gmra.mrb[0].mxu0 %v2676
    %v2738 = vpop.f32.mrb[0].mxu0
    %v2739 = vadd.f32 %v2651, %v2738
    %v2740 = vpop.f32.mrb[0].mxu0
    %v2741 = vpop.f32.mrb[0].mxu0
    %v2742 = vpop.f32.mrb[0].mxu0
    %2743 = vdwg.mxu0
    %2744 = vmatprep.subr.bf16.mxu0 %v2645
    %2745 = vmatpush1.bf16.xpose.msra.mxu0 %v2644
    %2746 = vmatprep.subr.bf16.mxu0 0
    %2747 = vmatpush1.bf16.xpose.msra.mxu0 0
    %2748 = vmatprep.subr.bf16.mxu0 0
    %2749 = vmatpush1.bf16.xpose.msra.mxu0 0
    %2750 = vmatprep.subr.bf16.mxu0 0
    %2751 = vmatpush1.bf16.xpose.msra.mxu0 0
    %2752 = vmatprep.subr.bf16.mxu0 0
    %2753 = vmatpush1.bf16.xpose.msra.mxu0 0
    %2754 = vmatprep.subr.bf16.mxu0 0
    %2755 = vmatpush1.bf16.xpose.msra.mxu0 0
    %2756 = vmatprep.subr.bf16.mxu0 0
    %2757 = vmatpush1.bf16.xpose.msra.mxu0 0
    %2758 = vmatprep.subr.bf16.mxu0 0
    %2759 = vmatpush1.bf16.xpose.msra.mxu0 0
    %2760 = vmatprep.subr.bf16.mxu0 0
    %2761 = vmatpush1.bf16.xpose.msra.mxu0 0
    %2762 = vmatprep.subr.bf16.mxu0 0
    %2763 = vmatpush1.bf16.xpose.msra.mxu0 0
    %2764 = vmatprep.subr.bf16.mxu0 0
    %2765 = vmatpush1.bf16.xpose.msra.mxu0 0
    %2766 = vmatprep.subr.bf16.mxu0 0
    %2767 = vmatpush1.bf16.xpose.msra.mxu0 0
    %2768 = vmatprep.subr.bf16.mxu0 0
    %2769 = vmatpush1.bf16.xpose.msra.mxu0 0
    %2770 = vmatprep.subr.bf16.mxu0 0
    %2771 = vmatpush1.bf16.xpose.msra.mxu0 0
    %2772 = vmatprep.subr.bf16.mxu0 0
    %2773 = vmatpush1.bf16.xpose.msra.mxu0 0
    %2774 = vmatprep.subr.bf16.mxu0 0
    %2775 = vmatpush1.bf16.xpose.msra.mxu0 0
    %2776 = vmatprep.mubr.bf16.mxu0 %v2692
    %2777 = vmatmul.mubr.bf16.gmra.mrb[0].mxu0 %v2691
    %v2778 = vpop.f32.mrb[0].mxu0
    %v2779 = vadd.f32 %v2739, %v2778
    %v2780 = vpop.f32.mrb[0].mxu0
    %v2781 = vpop.f32.mrb[0].mxu0
    %v2782 = vpop.f32.mrb[0].mxu0
    %2783 = vdwg.mxu0
    %2784 = vmatprep.subr.bf16.mxu0 0
    %2785 = vmatpush1.bf16.xpose.msra.mxu0 %v2702
    %2786 = vmatprep.subr.bf16.mxu0 0
    %2787 = vmatpush1.bf16.xpose.msra.mxu0 0
    %2788 = vmatprep.subr.bf16.mxu0 0
    %2789 = vmatpush1.bf16.xpose.msra.mxu0 0
    %2790 = vmatprep.subr.bf16.mxu0 0
    %2791 = vmatpush1.bf16.xpose.msra.mxu0 0
    %2792 = vmatprep.subr.bf16.mxu0 0
    %2793 = vmatpush1.bf16.xpose.msra.mxu0 0
    %2794 = vmatprep.subr.bf16.mxu0 0
    %2795 = vmatpush1.bf16.xpose.msra.mxu0 0
    %2796 = vmatprep.subr.bf16.mxu0 0
    %2797 = vmatpush1.bf16.xpose.msra.mxu0 0
    %2798 = vmatprep.subr.bf16.mxu0 0
    %2799 = vmatpush1.bf16.xpose.msra.mxu0 0
    %2800 = vmatprep.subr.bf16.mxu0 0
    %2801 = vmatpush1.bf16.xpose.msra.mxu0 0
    %2802 = vmatprep.subr.bf16.mxu0 0
    %2803 = vmatpush1.bf16.xpose.msra.mxu0 0
    %2804 = vmatprep.subr.bf16.mxu0 0
    %2805 = vmatpush1.bf16.xpose.msra.mxu0 0
    %2806 = vmatprep.subr.bf16.mxu0 0
    %2807 = vmatpush1.bf16.xpose.msra.mxu0 0
    %2808 = vmatprep.subr.bf16.mxu0 0
    %2809 = vmatpush1.bf16.xpose.msra.mxu0 0
    %2810 = vmatprep.subr.bf16.mxu0 0
    %2811 = vmatpush1.bf16.xpose.msra.mxu0 0
    %2812 = vmatprep.subr.bf16.mxu0 0
    %2813 = vmatpush1.bf16.xpose.msra.mxu0 0
    %2814 = vmatprep.subr.bf16.mxu0 0
    %2815 = vmatpush1.bf16.xpose.msra.mxu0 0
    %2816 = vmatprep.mubr.bf16.mxu0 0
    %2817 = vmatmul.mubr.bf16.gmra.mrb[0].mxu0 %v2699
    %v2818 = vpop.f32.mrb[0].mxu0
    %v2819 = vadd.f32 %v2779, %v2818
    %v2820 = vpop.f32.mrb[0].mxu0
    %v2821 = vpop.f32.mrb[0].mxu0
    %v2822 = vpop.f32.mrb[0].mxu0
    %2823 = vdwg.mxu0
    %v2824 = vtanh.pop %v2819
    %vm2825 = vcmask 123904
    %2826 = vst.msk [vmem:[#allocation8] sm:$0x3] %vm2825, %v2824
    // Predicated region
    $region42: #{tpu_custom_call.1} parent=1 // pred_check
      _
    $region43: #{tpu_custom_call.1} parent=1 // pred_check_branch
      %2828 = sbr.rel (0) target = $region45
    $region44: #{tpu_custom_call.1} parent=1 // pred_region
      %s2830 = ssub.s32 32, 32
      %2831 = vsyncadd [#allocation4], %s2830
      %s2833 = sshll.u32 [#allocation8], 4
      %s2834 = int_to_ptr.vmem [resolvable:$true] %s2833
      %2836 = dma.vmem_to_hbm [thread:$0]  %s2834, 32, %s7, [#allocation4]
    $region45: #{tpu_custom_call.1} parent=1 // pred_fallthru
      _
    // Predicated region
    $region46: #{tpu_custom_call.1} parent=1 // pred_check
      _
    $region47: #{tpu_custom_call.1} parent=1 // pred_check_branch
      %2838 = sbr.rel (0) target = $region49
    $region48: #{tpu_custom_call.1} parent=1 // pred_region
      %2839 = dma.done [#allocation4], 32
    $region49: #{tpu_custom_call.1} parent=1 // pred_fallthru
      _
    %2840 = vsyncpa [#allocation3], 1
    %2841 = vsyncpa [#allocation6], 1
    %2842 = vsyncpa [#allocation4], 1

</llo_original>
